<compile_context>
chip_gen: v5e
topology: v5e:2x2
jax: 0.10.0
libtpu: 0.0.40
codegen_flags: <defaults>
</compile_context>

<pallas_src>
import functools

import jax
import jax.numpy as jnp
from jax import lax
from jax.experimental import pallas as pl
from jax.experimental.pallas import tpu as pltpu

EPS = 1e-5                        # nn.BatchNorm2d default eps
VMEM_LIMIT = 32 * 1024 * 1024     # explicit scoped-VMEM budget (fits every gen)


# ---------------- small helpers ----------------

def _round_up(x, m):
    return (x + m - 1) // m * m


def _pad_axis(a, axis, target):
    pad = target - a.shape[axis]
    if pad == 0:
        return a
    widths = [(0, 0)] * a.ndim
    widths[axis] = (0, pad)
    return jnp.pad(a, widths)


def _im2col_cnhw(x_cnhw, k=3, stride=2):
    """Patches of a (C, N, H, W) tensor for a stride-2, k x k VALID conv.

    Returns (C*k*k, N*OH*OW): rows ordered (c, kh, kw) to match
    torch_weight.reshape(Cout, Cin*k*k); columns ordered (n, oh, ow).
    Built with strided slices + a single stack -- no activation transpose.
    """
    C, N, H, W = x_cnhw.shape
    OH = (H - k) // stride + 1
    OW = (W - k) // stride + 1
    cols = []
    for kh in range(k):
        for kw in range(k):
            cols.append(
                x_cnhw[:, :,
                       kh:kh + stride * (OH - 1) + 1:stride,
                       kw:kw + stride * (OW - 1) + 1:stride])   # (C, N, OH, OW)
    p = jnp.stack(cols, axis=1)                                  # (C, k*k, N, OH, OW)
    return p.reshape(C * k * k, N * OH * OW), OH, OW


# ---------------- Pallas kernels ----------------

def _conv_bn_relu_kernel(p_ref, w_ref, g_ref, b_ref, o_ref, sum_ref, ssq_ref,
                         *, m_total):
    # grid = (2, num_m_tiles): axis 0 = pass (slow), axis 1 = M tile (fast).
    # p_ref: (Kpad, TM) bf16   w_ref: (Cout, Kpad) bf16
    # g_ref/b_ref: (Cout, 1) f32   o_ref: (Cout, TM) f32
    pas = pl.program_id(0)
    mi = pl.program_id(1)

    @pl.when((pas == 0) & (mi == 0))
    def _():
        sum_ref[...] = jnp.zeros_like(sum_ref)
        ssq_ref[...] = jnp.zeros_like(ssq_ref)

    # (Cout, Kpad) @ (Kpad, TM) -> (Cout, TM); M on the lane axis.
    y = jnp.dot(w_ref[...], p_ref[...], preferred_element_type=jnp.float32)

    @pl.when(pas == 0)
    def _():
        # Zero-padded patch columns contribute 0 to both accumulators.
        sum_ref[...] += jnp.sum(y, axis=1, keepdims=True)
        ssq_ref[...] += jnp.sum(y * y, axis=1, keepdims=True)
        o_ref[...] = y                      # placeholder; overwritten in pass 1

    @pl.when(pas == 1)
    def _():
        inv_m = 1.0 / m_total
        mean = sum_ref[...] * inv_m
        var = jnp.maximum(ssq_ref[...] * inv_m - mean * mean, 0.0)
        inv_std = lax.rsqrt(var + EPS)
        o_ref[...] = jnp.maximum(
            (y - mean) * inv_std * g_ref[...] + b_ref[...], 0.0)


def _fc_relu_kernel(x_ref, w_ref, b_ref, o_ref, acc_ref):
    # grid = (C2,): stream one channel-slab of features/weights per step.
    c = pl.program_id(0)

    @pl.when(c == 0)
    def _():
        acc_ref[...] = jnp.zeros_like(acc_ref)

    x = x_ref[0].astype(jnp.bfloat16)       # (N, S)
    w = w_ref[0]                            # (L, S)  bf16 slab of the fc weight
    acc_ref[...] += lax.dot_general(
        x, w, dimension_numbers=(((1,), (1,)), ((), ())),
        preferred_element_type=jnp.float32)  # (N, L)

    @pl.when(c == pl.num_programs(0) - 1)
    def _():
        o_ref[...] = jnp.maximum(acc_ref[...] + b_ref[...], 0.0)


# ---------------- wrappers ----------------

def conv_bn_relu(x_cnhw, w2d, gamma, beta):
    """Fused 3x3/stride-2/no-bias conv + BatchNorm(batch stats) + ReLU.

    x_cnhw: (Cin, N, H, W) f32     w2d: (Cout, Kpad) bf16
    Returns (Cout, N, OH, OW) f32.
    """
    cout, kpad = w2d.shape
    _, n, _, _ = x_cnhw.shape
    patches, oh, ow = _im2col_cnhw(x_cnhw.astype(jnp.bfloat16))
    m = n * oh * ow
    patches = _pad_axis(patches, 0, kpad)        # zero rows: no-op in the GEMM
    tm = min(512, _round_up(m, 128))             # M tile (lane axis, mult. of 128)
    m_pad = _round_up(m, tm)
    patches = _pad_axis(patches, 1, m_pad)       # zero cols: excluded from BN stats

    kernel = functools.partial(_conv_bn_relu_kernel, m_total=float(m))
    out = pl.pallas_call(
        kernel,
        out_shape=jax.ShapeDtypeStruct((cout, m_pad), jnp.float32),
        grid_spec=pltpu.PrefetchScalarGridSpec(
            num_scalar_prefetch=0,
            grid=(2, m_pad // tm),               # (pass, m-tile)
            in_specs=[
                pl.BlockSpec((kpad, tm), lambda ps, i: (0, i)),
                pl.BlockSpec((cout, kpad), lambda ps, i: (0, 0)),
                pl.BlockSpec((cout, 1), lambda ps, i: (0, 0)),
                pl.BlockSpec((cout, 1), lambda ps, i: (0, 0)),
            ],
            out_specs=pl.BlockSpec((cout, tm), lambda ps, i: (0, i)),
            scratch_shapes=[pltpu.VMEM((cout, 1), jnp.float32),
                            pltpu.VMEM((cout, 1), jnp.float32)],
        ),
        compiler_params=pltpu.CompilerParams(
            # Both axes sequential: pass 1 needs the *global* BN statistics
            # accumulated in (per-core) scratch during pass 0.
            dimension_semantics=("arbitrary", "arbitrary"),
            vmem_limit_bytes=VMEM_LIMIT),
    )(patches, w2d, gamma.reshape(cout, 1), beta.reshape(cout, 1))
    return out[:, :m].reshape(cout, n, oh, ow)


def fc_relu(x_cns, w_cls, bias):
    """relu(flatten(x) @ W.T + b), contraction tiled over channel slabs.

    x_cns: (C2, N, S2) f32 channel-major features
    w_cls: (C2, L, S2) bf16 -- torch fc weight (L, C2*S2) reshaped once at prep
    """
    c2, n, s2 = x_cns.shape
    l = w_cls.shape[1]
    return pl.pallas_call(
        _fc_relu_kernel,
        out_shape=jax.ShapeDtypeStruct((n, l), jnp.float32),
        grid_spec=pltpu.PrefetchScalarGridSpec(
            num_scalar_prefetch=0,
            grid=(c2,),
            in_specs=[
                pl.BlockSpec((1, n, s2), lambda i: (i, 0, 0)),
                pl.BlockSpec((1, l, s2), lambda i: (i, 0, 0)),
                pl.BlockSpec((1, l), lambda i: (0, 0)),
            ],
            out_specs=pl.BlockSpec((n, l), lambda i: (0, 0)),
            scratch_shapes=[pltpu.VMEM((n, l), jnp.float32)],
        ),
        compiler_params=pltpu.CompilerParams(
            dimension_semantics=("arbitrary",),   # contraction axis
            vmem_limit_bytes=VMEM_LIMIT),
    )(x_cns, w_cls, bias.reshape(1, l))


def prepare_params(p):
    """One-time (outside the forward pass) conversion of torch-layout params."""
    c1 = p["conv1_w"]                   # (C1, 3, 3, 3)
    c2 = p["conv2_w"]                   # (C2, C1, 3, 3)
    l, f = p["fc_w"].shape
    c2_out = c2.shape[0]
    s2 = f // c2_out

    def conv_w2d(w):
        w2 = w.reshape(w.shape[0], -1)                # cols ordered (cin, kh, kw)
        return _pad_axis(w2, 1, _round_up(w2.shape[1], 8)).astype(jnp.bfloat16)

    return {
        "conv1_w2d": conv_w2d(c1),
        "conv2_w2d": conv_w2d(c2),
        "bn1_g": p["bn1_g"].astype(jnp.float32),
        "bn1_b": p["bn1_b"].astype(jnp.float32),
        "bn2_g": p["bn2_g"].astype(jnp.float32),
        "bn2_b": p["bn2_b"].astype(jnp.float32),
        # torch.flatten order per sample is (c, oh, ow): view fc_w as
        # (L, C2, S2) and move channels first so the fc kernel streams one
        # channel slab per grid step against the (C2, N, S2) activations.
        "fc_w_r": p["fc_w"].reshape(l, c2_out, s2).transpose(1, 0, 2)
                           .astype(jnp.bfloat16),
        "fc_b": p["fc_b"].astype(jnp.float32),
    }


def encoder_forward(x_nchw, params):
    # Single layout change at the entry: NCHW -> (C, N, H, W).
    x = x_nchw.transpose(1, 0, 2, 3)
    h1 = conv_bn_relu(x, params["conv1_w2d"], params["bn1_g"], params["bn1_b"])
    h2 = conv_bn_relu(h1, params["conv2_w2d"], params["bn2_g"], params["bn2_b"])
    c2, n, oh2, ow2 = h2.shape
    x_cns = h2.reshape(c2, n, oh2 * ow2)    # contiguous; flatten order handled by fc_w_r
    return fc_relu(x_cns, params["fc_w_r"], params["fc_b"])


if __name__ == "__main__":
    key = jax.random.PRNGKey(0)
    c = 4             # params['num_channels']  (small synthetic value)
    latent_dims = 32  # params['latent_dims']   (small synthetic value)
    N, H, W = 2, 16, 16

    oh1 = (H - 3) // 2 + 1          # 7
    oh2 = (oh1 - 3) // 2 + 1        # 3
    in_feat = (2 * c) * oh2 * oh2   # 72  (508032 in the full-size model)

    ks = jax.random.split(key, 4)
    raw_params = {
        "conv1_w": jax.random.normal(ks[0], (c, 3, 3, 3), jnp.float32) * 0.1,
        "conv2_w": jax.random.normal(ks[1], (2 * c, c, 3, 3), jnp.float32) * 0.1,
        "bn1_g": jnp.ones((c,), jnp.float32),
        "bn1_b": jnp.zeros((c,), jnp.float32),
        "bn2_g": jnp.ones((2 * c,), jnp.float32),
        "bn2_b": jnp.zeros((2 * c,), jnp.float32),
        "fc_w": jax.random.normal(ks[2], (latent_dims, in_feat), jnp.float32) * 0.05,
        "fc_b": jnp.zeros((latent_dims,), jnp.float32),
    }
    params = prepare_params(raw_params)     # one-time, outside the hot path
    x = jax.random.normal(ks[3], (N, 3, H, W), jnp.float32)

    out = jax.jit(lambda xx: encoder_forward(xx, params))(x)
    jax.block_until_ready(out)
    assert out.shape == (N, latent_dims)
    assert bool(jnp.all(out >= 0.0))        # final ReLU
    print("KERNEL_OK")
</pallas_src>

<mosaic_0001>
module attributes {stable_mosaic.version = 11 : i64} {
  func.func @_conv_bn_relu_kernel(%arg0: i32, %arg1: i32, %arg2: memref<32x128xbf16, #tpu.memory_space<vmem>>, %arg3: memref<4x32xbf16, #tpu.memory_space<vmem>>, %arg4: memref<4x1xf32, #tpu.memory_space<vmem>>, %arg5: memref<4x1xf32, #tpu.memory_space<vmem>>, %arg6: memref<4x128xf32, #tpu.memory_space<vmem>>, %arg7: memref<4x1xf32, #tpu.memory_space<vmem>>, %arg8: memref<4x1xf32, #tpu.memory_space<vmem>>) attributes {dimension_semantics = [#tpu.dimension_semantics<arbitrary>, #tpu.dimension_semantics<arbitrary>], iteration_bounds = array<i64: 2, 1>, scalar_prefetch = 0 : i64, scratch_operands = 2 : i64, tpu.core_type = #tpu.core_type<tc>, window_params = [{transform_indices = @transform_0, window_bounds = array<i64: 32, 128>}, {pipeline_mode = #tpu.pipeline_mode<synchronous>, transform_indices = @transform_1, window_bounds = array<i64: 4, 32>}, {pipeline_mode = #tpu.pipeline_mode<synchronous>, transform_indices = @transform_2, window_bounds = array<i64: 4, 1>}, {pipeline_mode = #tpu.pipeline_mode<synchronous>, transform_indices = @transform_3, window_bounds = array<i64: 4, 1>}, {transform_indices = @transform_4, window_bounds = array<i64: 4, 128>}]} {
    %c0_i32 = arith.constant 0 : i32
    %0 = arith.cmpi eq, %arg0, %c0_i32 : i32
    %c0_i32_0 = arith.constant 0 : i32
    %1 = arith.cmpi eq, %arg1, %c0_i32_0 : i32
    %2 = arith.andi %0, %1 : i1
    %3 = arith.extui %2 : i1 to i32
    %c0_i32_1 = arith.constant 0 : i32
    %4 = arith.cmpi ne, %3, %c0_i32_1 : i32
    scf.if %4 {
      %cst_8 = arith.constant 0.000000e+00 : f32
      %14 = vector.broadcast %cst_8 : f32 to vector<4x1xf32>
      %c0_9 = arith.constant 0 : index
      %c0_10 = arith.constant 0 : index
      %15 = vector.load %arg7[%c0_9, %c0_10] : memref<4x1xf32, #tpu.memory_space<vmem>>, vector<4x1xf32>
      tpu.vector_store %arg7[%c0_9, %c0_10], %14 {strides = array<i32>} : memref<4x1xf32, #tpu.memory_space<vmem>>, vector<4x1xf32>,
      %cst_11 = arith.constant 0.000000e+00 : f32
      %16 = vector.broadcast %cst_11 : f32 to vector<4x1xf32>
      %c0_12 = arith.constant 0 : index
      %c0_13 = arith.constant 0 : index
      %17 = vector.load %arg8[%c0_12, %c0_13] : memref<4x1xf32, #tpu.memory_space<vmem>>, vector<4x1xf32>
      tpu.vector_store %arg8[%c0_12, %c0_13], %16 {strides = array<i32>} : memref<4x1xf32, #tpu.memory_space<vmem>>, vector<4x1xf32>,
    } else {
    }
    %c0 = arith.constant 0 : index
    %c0_2 = arith.constant 0 : index
    %5 = vector.load %arg3[%c0, %c0_2] : memref<4x32xbf16, #tpu.memory_space<vmem>>, vector<4x32xbf16>
    %c0_3 = arith.constant 0 : index
    %c0_4 = arith.constant 0 : index
    %6 = vector.load %arg2[%c0_3, %c0_4] : memref<32x128xbf16, #tpu.memory_space<vmem>>, vector<32x128xbf16>
    %cst = arith.constant dense<0.000000e+00> : vector<4x128xf32>
    %7 = tpu.matmul %5, %6, %cst {dimension_numbers = #tpu.dot_dimension_numbers<[1], [0], [0], [1], [0, 0, 1, 1], [], []>} : vector<4x32xbf16>, vector<32x128xbf16>, vector<4x128xf32> -> vector<4x128xf32>
    %c0_i32_5 = arith.constant 0 : i32
    %8 = arith.cmpi eq, %arg0, %c0_i32_5 : i32
    %9 = arith.extui %8 : i1 to i32
    %c0_i32_6 = arith.constant 0 : i32
    %10 = arith.cmpi ne, %9, %c0_i32_6 : i32
    scf.if %10 {
      %c0_8 = arith.constant 0 : index
      %c0_9 = arith.constant 0 : index
      %14 = vector.load %arg7[%c0_8, %c0_9] : memref<4x1xf32, #tpu.memory_space<vmem>>, vector<4x1xf32>
      %cst_10 = arith.constant dense<0.000000e+00> : vector<4xf32>
      %15 = vector.multi_reduction <add>, %7, %cst_10 [1] : vector<4x128xf32> to vector<4xf32>
      %16 = vector.shape_cast %15 : vector<4xf32> to vector<4x1xf32>
      %17 = arith.addf %14, %16 : vector<4x1xf32>
      %c0_11 = arith.constant 0 : index
      %c0_12 = arith.constant 0 : index
      %18 = vector.load %arg7[%c0_11, %c0_12] : memref<4x1xf32, #tpu.memory_space<vmem>>, vector<4x1xf32>
      tpu.vector_store %arg7[%c0_11, %c0_12], %17 {strides = array<i32>} : memref<4x1xf32, #tpu.memory_space<vmem>>, vector<4x1xf32>,
      %c0_13 = arith.constant 0 : index
      %c0_14 = arith.constant 0 : index
      %19 = vector.load %arg8[%c0_13, %c0_14] : memref<4x1xf32, #tpu.memory_space<vmem>>, vector<4x1xf32>
      %20 = arith.mulf %7, %7 : vector<4x128xf32>
      %cst_15 = arith.constant dense<0.000000e+00> : vector<4xf32>
      %21 = vector.multi_reduction <add>, %20, %cst_15 [1] : vector<4x128xf32> to vector<4xf32>
      %22 = vector.shape_cast %21 : vector<4xf32> to vector<4x1xf32>
      %23 = arith.addf %19, %22 : vector<4x1xf32>
      %c0_16 = arith.constant 0 : index
      %c0_17 = arith.constant 0 : index
      %24 = vector.load %arg8[%c0_16, %c0_17] : memref<4x1xf32, #tpu.memory_space<vmem>>, vector<4x1xf32>
      tpu.vector_store %arg8[%c0_16, %c0_17], %23 {strides = array<i32>} : memref<4x1xf32, #tpu.memory_space<vmem>>, vector<4x1xf32>,
      %c0_18 = arith.constant 0 : index
      %c0_19 = arith.constant 0 : index
      %25 = vector.load %arg6[%c0_18, %c0_19] : memref<4x128xf32, #tpu.memory_space<vmem>>, vector<4x128xf32>
      tpu.vector_store %arg6[%c0_18, %c0_19], %7 {strides = array<i32>} : memref<4x128xf32, #tpu.memory_space<vmem>>, vector<4x128xf32>,
    } else {
    }
    %c1_i32 = arith.constant 1 : i32
    %11 = arith.cmpi eq, %arg0, %c1_i32 : i32
    %12 = arith.extui %11 : i1 to i32
    %c0_i32_7 = arith.constant 0 : i32
    %13 = arith.cmpi ne, %12, %c0_i32_7 : i32
    scf.if %13 {
      %c0_8 = arith.constant 0 : index
      %c0_9 = arith.constant 0 : index
      %14 = vector.load %arg7[%c0_8, %c0_9] : memref<4x1xf32, #tpu.memory_space<vmem>>, vector<4x1xf32>
      %cst_10 = arith.constant 0.0102040814 : f32
      %15 = vector.broadcast %cst_10 : f32 to vector<4x1xf32>
      %16 = arith.mulf %14, %15 : vector<4x1xf32>
      %c0_11 = arith.constant 0 : index
      %c0_12 = arith.constant 0 : index
      %17 = vector.load %arg8[%c0_11, %c0_12] : memref<4x1xf32, #tpu.memory_space<vmem>>, vector<4x1xf32>
      %cst_13 = arith.constant 0.0102040814 : f32
      %18 = vector.broadcast %cst_13 : f32 to vector<4x1xf32>
      %19 = arith.mulf %17, %18 : vector<4x1xf32>
      %20 = arith.mulf %16, %16 : vector<4x1xf32>
      %21 = arith.subf %19, %20 : vector<4x1xf32>
      %cst_14 = arith.constant 0.000000e+00 : f32
      %22 = vector.broadcast %cst_14 : f32 to vector<4x1xf32>
      %23 = arith.maximumf %21, %22 : vector<4x1xf32>
      %cst_15 = arith.constant 9.99999974E-6 : f32
      %24 = vector.broadcast %cst_15 : f32 to vector<4x1xf32>
      %25 = arith.addf %23, %24 : vector<4x1xf32>
      %26 = math.rsqrt %25 : vector<4x1xf32>
      %27 = vector.broadcast %16 : vector<4x1xf32> to vector<4x128xf32>
      %28 = arith.subf %7, %27 : vector<4x128xf32>
      %29 = vector.broadcast %26 : vector<4x1xf32> to vector<4x128xf32>
      %30 = arith.mulf %28, %29 : vector<4x128xf32>
      %c0_16 = arith.constant 0 : index
      %c0_17 = arith.constant 0 : index
      %31 = vector.load %arg4[%c0_16, %c0_17] : memref<4x1xf32, #tpu.memory_space<vmem>>, vector<4x1xf32>
      %32 = vector.broadcast %31 : vector<4x1xf32> to vector<4x128xf32>
      %33 = arith.mulf %30, %32 : vector<4x128xf32>
      %c0_18 = arith.constant 0 : index
      %c0_19 = arith.constant 0 : index
      %34 = vector.load %arg5[%c0_18, %c0_19] : memref<4x1xf32, #tpu.memory_space<vmem>>, vector<4x1xf32>
      %35 = vector.broadcast %34 : vector<4x1xf32> to vector<4x128xf32>
      %36 = arith.addf %33, %35 : vector<4x128xf32>
      %cst_20 = arith.constant 0.000000e+00 : f32
      %37 = vector.broadcast %cst_20 : f32 to vector<4x128xf32>
      %38 = arith.maximumf %36, %37 : vector<4x128xf32>
      %c0_21 = arith.constant 0 : index
      %c0_22 = arith.constant 0 : index
      %39 = vector.load %arg6[%c0_21, %c0_22] : memref<4x128xf32, #tpu.memory_space<vmem>>, vector<4x128xf32>
      tpu.vector_store %arg6[%c0_21, %c0_22], %38 {strides = array<i32>} : memref<4x128xf32, #tpu.memory_space<vmem>>, vector<4x128xf32>,
    } else {
    }
    return
  }
  func.func @transform_0(%arg0: i32, %arg1: i32) -> (i32, i32) {
    %c0_i32 = arith.constant 0 : i32
    %c0_i32_0 = arith.constant 0 : i32
    return %c0_i32, %arg1 : i32, i32
  }
  func.func @transform_1(%arg0: i32, %arg1: i32) -> (i32, i32) {
    %c0_i32 = arith.constant 0 : i32
    %c0_i32_0 = arith.constant 0 : i32
    %c0_i32_1 = arith.constant 0 : i32
    return %c0_i32, %c0_i32_0 : i32, i32
  }
  func.func @transform_2(%arg0: i32, %arg1: i32) -> (i32, i32) {
    %c0_i32 = arith.constant 0 : i32
    %c0_i32_0 = arith.constant 0 : i32
    %c0_i32_1 = arith.constant 0 : i32
    return %c0_i32, %c0_i32_0 : i32, i32
  }
  func.func @transform_3(%arg0: i32, %arg1: i32) -> (i32, i32) {
    %c0_i32 = arith.constant 0 : i32
    %c0_i32_0 = arith.constant 0 : i32
    %c0_i32_1 = arith.constant 0 : i32
    return %c0_i32, %c0_i32_0 : i32, i32
  }
  func.func @transform_4(%arg0: i32, %arg1: i32) -> (i32, i32) {
    %c0_i32 = arith.constant 0 : i32
    %c0_i32_0 = arith.constant 0 : i32
    return %c0_i32, %arg1 : i32, i32
  }
}

module attributes {stable_mosaic.version = 11 : i64} {
  func.func @_conv_bn_relu_kernel(%arg0: i32, %arg1: i32, %arg2: memref<40x128xbf16, #tpu.memory_space<vmem>>, %arg3: memref<8x40xbf16, #tpu.memory_space<vmem>>, %arg4: memref<8x1xf32, #tpu.memory_space<vmem>>, %arg5: memref<8x1xf32, #tpu.memory_space<vmem>>, %arg6: memref<8x128xf32, #tpu.memory_space<vmem>>, %arg7: memref<8x1xf32, #tpu.memory_space<vmem>>, %arg8: memref<8x1xf32, #tpu.memory_space<vmem>>) attributes {dimension_semantics = [#tpu.dimension_semantics<arbitrary>, #tpu.dimension_semantics<arbitrary>], iteration_bounds = array<i64: 2, 1>, scalar_prefetch = 0 : i64, scratch_operands = 2 : i64, tpu.core_type = #tpu.core_type<tc>, window_params = [{transform_indices = @transform_0, window_bounds = array<i64: 40, 128>}, {pipeline_mode = #tpu.pipeline_mode<synchronous>, transform_indices = @transform_1, window_bounds = array<i64: 8, 40>}, {pipeline_mode = #tpu.pipeline_mode<synchronous>, transform_indices = @transform_2, window_bounds = array<i64: 8, 1>}, {pipeline_mode = #tpu.pipeline_mode<synchronous>, transform_indices = @transform_3, window_bounds = array<i64: 8, 1>}, {transform_indices = @transform_4, window_bounds = array<i64: 8, 128>}]} {
    %c0_i32 = arith.constant 0 : i32
    %0 = arith.cmpi eq, %arg0, %c0_i32 : i32
    %c0_i32_0 = arith.constant 0 : i32
    %1 = arith.cmpi eq, %arg1, %c0_i32_0 : i32
    %2 = arith.andi %0, %1 : i1
    %3 = arith.extui %2 : i1 to i32
    %c0_i32_1 = arith.constant 0 : i32
    %4 = arith.cmpi ne, %3, %c0_i32_1 : i32
    scf.if %4 {
      %cst_8 = arith.constant 0.000000e+00 : f32
      %14 = vector.broadcast %cst_8 : f32 to vector<8x1xf32>
      %c0_9 = arith.constant 0 : index
      %c0_10 = arith.constant 0 : index
      %15 = vector.load %arg7[%c0_9, %c0_10] : memref<8x1xf32, #tpu.memory_space<vmem>>, vector<8x1xf32>
      tpu.vector_store %arg7[%c0_9, %c0_10], %14 {strides = array<i32>} : memref<8x1xf32, #tpu.memory_space<vmem>>, vector<8x1xf32>,
      %cst_11 = arith.constant 0.000000e+00 : f32
      %16 = vector.broadcast %cst_11 : f32 to vector<8x1xf32>
      %c0_12 = arith.constant 0 : index
      %c0_13 = arith.constant 0 : index
      %17 = vector.load %arg8[%c0_12, %c0_13] : memref<8x1xf32, #tpu.memory_space<vmem>>, vector<8x1xf32>
      tpu.vector_store %arg8[%c0_12, %c0_13], %16 {strides = array<i32>} : memref<8x1xf32, #tpu.memory_space<vmem>>, vector<8x1xf32>,
    } else {
    }
    %c0 = arith.constant 0 : index
    %c0_2 = arith.constant 0 : index
    %5 = vector.load %arg3[%c0, %c0_2] : memref<8x40xbf16, #tpu.memory_space<vmem>>, vector<8x40xbf16>
    %c0_3 = arith.constant 0 : index
    %c0_4 = arith.constant 0 : index
    %6 = vector.load %arg2[%c0_3, %c0_4] : memref<40x128xbf16, #tpu.memory_space<vmem>>, vector<40x128xbf16>
    %cst = arith.constant dense<0.000000e+00> : vector<8x128xf32>
    %7 = tpu.matmul %5, %6, %cst {dimension_numbers = #tpu.dot_dimension_numbers<[1], [0], [0], [1], [0, 0, 1, 1], [], []>} : vector<8x40xbf16>, vector<40x128xbf16>, vector<8x128xf32> -> vector<8x128xf32>
    %c0_i32_5 = arith.constant 0 : i32
    %8 = arith.cmpi eq, %arg0, %c0_i32_5 : i32
    %9 = arith.extui %8 : i1 to i32
    %c0_i32_6 = arith.constant 0 : i32
    %10 = arith.cmpi ne, %9, %c0_i32_6 : i32
    scf.if %10 {
      %c0_8 = arith.constant 0 : index
      %c0_9 = arith.constant 0 : index
      %14 = vector.load %arg7[%c0_8, %c0_9] : memref<8x1xf32, #tpu.memory_space<vmem>>, vector<8x1xf32>
      %cst_10 = arith.constant dense<0.000000e+00> : vector<8xf32>
      %15 = vector.multi_reduction <add>, %7, %cst_10 [1] : vector<8x128xf32> to vector<8xf32>
      %16 = vector.shape_cast %15 : vector<8xf32> to vector<8x1xf32>
      %17 = arith.addf %14, %16 : vector<8x1xf32>
      %c0_11 = arith.constant 0 : index
      %c0_12 = arith.constant 0 : index
      %18 = vector.load %arg7[%c0_11, %c0_12] : memref<8x1xf32, #tpu.memory_space<vmem>>, vector<8x1xf32>
      tpu.vector_store %arg7[%c0_11, %c0_12], %17 {strides = array<i32>} : memref<8x1xf32, #tpu.memory_space<vmem>>, vector<8x1xf32>,
      %c0_13 = arith.constant 0 : index
      %c0_14 = arith.constant 0 : index
      %19 = vector.load %arg8[%c0_13, %c0_14] : memref<8x1xf32, #tpu.memory_space<vmem>>, vector<8x1xf32>
      %20 = arith.mulf %7, %7 : vector<8x128xf32>
      %cst_15 = arith.constant dense<0.000000e+00> : vector<8xf32>
      %21 = vector.multi_reduction <add>, %20, %cst_15 [1] : vector<8x128xf32> to vector<8xf32>
      %22 = vector.shape_cast %21 : vector<8xf32> to vector<8x1xf32>
      %23 = arith.addf %19, %22 : vector<8x1xf32>
      %c0_16 = arith.constant 0 : index
      %c0_17 = arith.constant 0 : index
      %24 = vector.load %arg8[%c0_16, %c0_17] : memref<8x1xf32, #tpu.memory_space<vmem>>, vector<8x1xf32>
      tpu.vector_store %arg8[%c0_16, %c0_17], %23 {strides = array<i32>} : memref<8x1xf32, #tpu.memory_space<vmem>>, vector<8x1xf32>,
      %c0_18 = arith.constant 0 : index
      %c0_19 = arith.constant 0 : index
      %25 = vector.load %arg6[%c0_18, %c0_19] : memref<8x128xf32, #tpu.memory_space<vmem>>, vector<8x128xf32>
      tpu.vector_store %arg6[%c0_18, %c0_19], %7 {strides = array<i32>} : memref<8x128xf32, #tpu.memory_space<vmem>>, vector<8x128xf32>,
    } else {
    }
    %c1_i32 = arith.constant 1 : i32
    %11 = arith.cmpi eq, %arg0, %c1_i32 : i32
    %12 = arith.extui %11 : i1 to i32
    %c0_i32_7 = arith.constant 0 : i32
    %13 = arith.cmpi ne, %12, %c0_i32_7 : i32
    scf.if %13 {
      %c0_8 = arith.constant 0 : index
      %c0_9 = arith.constant 0 : index
      %14 = vector.load %arg7[%c0_8, %c0_9] : memref<8x1xf32, #tpu.memory_space<vmem>>, vector<8x1xf32>
      %cst_10 = arith.constant 0.055555556 : f32
      %15 = vector.broadcast %cst_10 : f32 to vector<8x1xf32>
      %16 = arith.mulf %14, %15 : vector<8x1xf32>
      %c0_11 = arith.constant 0 : index
      %c0_12 = arith.constant 0 : index
      %17 = vector.load %arg8[%c0_11, %c0_12] : memref<8x1xf32, #tpu.memory_space<vmem>>, vector<8x1xf32>
      %cst_13 = arith.constant 0.055555556 : f32
      %18 = vector.broadcast %cst_13 : f32 to vector<8x1xf32>
      %19 = arith.mulf %17, %18 : vector<8x1xf32>
      %20 = arith.mulf %16, %16 : vector<8x1xf32>
      %21 = arith.subf %19, %20 : vector<8x1xf32>
      %cst_14 = arith.constant 0.000000e+00 : f32
      %22 = vector.broadcast %cst_14 : f32 to vector<8x1xf32>
      %23 = arith.maximumf %21, %22 : vector<8x1xf32>
      %cst_15 = arith.constant 9.99999974E-6 : f32
      %24 = vector.broadcast %cst_15 : f32 to vector<8x1xf32>
      %25 = arith.addf %23, %24 : vector<8x1xf32>
      %26 = math.rsqrt %25 : vector<8x1xf32>
      %27 = vector.broadcast %16 : vector<8x1xf32> to vector<8x128xf32>
      %28 = arith.subf %7, %27 : vector<8x128xf32>
      %29 = vector.broadcast %26 : vector<8x1xf32> to vector<8x128xf32>
      %30 = arith.mulf %28, %29 : vector<8x128xf32>
      %c0_16 = arith.constant 0 : index
      %c0_17 = arith.constant 0 : index
      %31 = vector.load %arg4[%c0_16, %c0_17] : memref<8x1xf32, #tpu.memory_space<vmem>>, vector<8x1xf32>
      %32 = vector.broadcast %31 : vector<8x1xf32> to vector<8x128xf32>
      %33 = arith.mulf %30, %32 : vector<8x128xf32>
      %c0_18 = arith.constant 0 : index
      %c0_19 = arith.constant 0 : index
      %34 = vector.load %arg5[%c0_18, %c0_19] : memref<8x1xf32, #tpu.memory_space<vmem>>, vector<8x1xf32>
      %35 = vector.broadcast %34 : vector<8x1xf32> to vector<8x128xf32>
      %36 = arith.addf %33, %35 : vector<8x128xf32>
      %cst_20 = arith.constant 0.000000e+00 : f32
      %37 = vector.broadcast %cst_20 : f32 to vector<8x128xf32>
      %38 = arith.maximumf %36, %37 : vector<8x128xf32>
      %c0_21 = arith.constant 0 : index
      %c0_22 = arith.constant 0 : index
      %39 = vector.load %arg6[%c0_21, %c0_22] : memref<8x128xf32, #tpu.memory_space<vmem>>, vector<8x128xf32>
      tpu.vector_store %arg6[%c0_21, %c0_22], %38 {strides = array<i32>} : memref<8x128xf32, #tpu.memory_space<vmem>>, vector<8x128xf32>,
    } else {
    }
    return
  }
  func.func @transform_0(%arg0: i32, %arg1: i32) -> (i32, i32) {
    %c0_i32 = arith.constant 0 : i32
    %c0_i32_0 = arith.constant 0 : i32
    return %c0_i32, %arg1 : i32, i32
  }
  func.func @transform_1(%arg0: i32, %arg1: i32) -> (i32, i32) {
    %c0_i32 = arith.constant 0 : i32
    %c0_i32_0 = arith.constant 0 : i32
    %c0_i32_1 = arith.constant 0 : i32
    return %c0_i32, %c0_i32_0 : i32, i32
  }
  func.func @transform_2(%arg0: i32, %arg1: i32) -> (i32, i32) {
    %c0_i32 = arith.constant 0 : i32
    %c0_i32_0 = arith.constant 0 : i32
    %c0_i32_1 = arith.constant 0 : i32
    return %c0_i32, %c0_i32_0 : i32, i32
  }
  func.func @transform_3(%arg0: i32, %arg1: i32) -> (i32, i32) {
    %c0_i32 = arith.constant 0 : i32
    %c0_i32_0 = arith.constant 0 : i32
    %c0_i32_1 = arith.constant 0 : i32
    return %c0_i32, %c0_i32_0 : i32, i32
  }
  func.func @transform_4(%arg0: i32, %arg1: i32) -> (i32, i32) {
    %c0_i32 = arith.constant 0 : i32
    %c0_i32_0 = arith.constant 0 : i32
    return %c0_i32, %arg1 : i32, i32
  }
}

module attributes {stable_mosaic.version = 11 : i64} {
  func.func @_fc_relu_kernel(%arg0: i32, %arg1: memref<1x2x9xf32, #tpu.memory_space<vmem>>, %arg2: memref<1x32x9xbf16, #tpu.memory_space<vmem>>, %arg3: memref<1x32xf32, #tpu.memory_space<vmem>>, %arg4: memref<2x32xf32, #tpu.memory_space<vmem>>, %arg5: memref<2x32xf32, #tpu.memory_space<vmem>>) attributes {dimension_semantics = [#tpu.dimension_semantics<arbitrary>], iteration_bounds = array<i64: 8>, scalar_prefetch = 0 : i64, scratch_operands = 1 : i64, tpu.core_type = #tpu.core_type<tc>, window_params = [{transform_indices = @transform_0, window_bounds = array<i64: 1, 2, 9>}, {transform_indices = @transform_1, window_bounds = array<i64: 1, 32, 9>}, {pipeline_mode = #tpu.pipeline_mode<synchronous>, transform_indices = @transform_2, window_bounds = array<i64: 1, 32>}, {pipeline_mode = #tpu.pipeline_mode<synchronous>, transform_indices = @transform_3, window_bounds = array<i64: 2, 32>}]} {
    %c0_i32 = arith.constant 0 : i32
    %0 = arith.cmpi eq, %arg0, %c0_i32 : i32
    %1 = arith.extui %0 : i1 to i32
    %c0_i32_0 = arith.constant 0 : i32
    %2 = arith.cmpi ne, %1, %c0_i32_0 : i32
    scf.if %2 {
      %cst_11 = arith.constant 0.000000e+00 : f32
      %15 = vector.broadcast %cst_11 : f32 to vector<2x32xf32>
      %c0_12 = arith.constant 0 : index
      %c0_13 = arith.constant 0 : index
      %16 = vector.load %arg5[%c0_12, %c0_13] : memref<2x32xf32, #tpu.memory_space<vmem>>, vector<2x32xf32>
      tpu.vector_store %arg5[%c0_12, %c0_13], %15 {strides = array<i32>} : memref<2x32xf32, #tpu.memory_space<vmem>>, vector<2x32xf32>,
    } else {
    }
    %c0 = arith.constant 0 : index
    %c0_1 = arith.constant 0 : index
    %c0_2 = arith.constant 0 : index
    %3 = vector.load %arg1[%c0, %c0_1, %c0_2] : memref<1x2x9xf32, #tpu.memory_space<vmem>>, vector<1x2x9xf32>
    %4 = vector.shape_cast %3 : vector<1x2x9xf32> to vector<2x9xf32>
    %5 = arith.truncf %4 : vector<2x9xf32> to vector<2x9xbf16>
    %c0_3 = arith.constant 0 : index
    %c0_4 = arith.constant 0 : index
    %c0_5 = arith.constant 0 : index
    %6 = vector.load %arg2[%c0_3, %c0_4, %c0_5] : memref<1x32x9xbf16, #tpu.memory_space<vmem>>, vector<1x32x9xbf16>
    %7 = vector.shape_cast %6 : vector<1x32x9xbf16> to vector<32x9xbf16>
    %c0_6 = arith.constant 0 : index
    %c0_7 = arith.constant 0 : index
    %8 = vector.load %arg5[%c0_6, %c0_7] : memref<2x32xf32, #tpu.memory_space<vmem>>, vector<2x32xf32>
    %cst = arith.constant dense<0.000000e+00> : vector<2x32xf32>
    %9 = tpu.matmul %5, %7, %cst {dimension_numbers = #tpu.dot_dimension_numbers<[1], [1], [0], [0], [0, 0, 1, 0], [], []>} : vector<2x9xbf16>, vector<32x9xbf16>, vector<2x32xf32> -> vector<2x32xf32>
    %10 = arith.addf %8, %9 : vector<2x32xf32>
    %c0_8 = arith.constant 0 : index
    %c0_9 = arith.constant 0 : index
    %11 = vector.load %arg5[%c0_8, %c0_9] : memref<2x32xf32, #tpu.memory_space<vmem>>, vector<2x32xf32>
    tpu.vector_store %arg5[%c0_8, %c0_9], %10 {strides = array<i32>} : memref<2x32xf32, #tpu.memory_space<vmem>>, vector<2x32xf32>,
    %c7_i32 = arith.constant 7 : i32
    %12 = arith.cmpi eq, %arg0, %c7_i32 : i32
    %13 = arith.extui %12 : i1 to i32
    %c0_i32_10 = arith.constant 0 : i32
    %14 = arith.cmpi ne, %13, %c0_i32_10 : i32
    scf.if %14 {
      %c0_11 = arith.constant 0 : index
      %c0_12 = arith.constant 0 : index
      %15 = vector.load %arg5[%c0_11, %c0_12] : memref<2x32xf32, #tpu.memory_space<vmem>>, vector<2x32xf32>
      %c0_13 = arith.constant 0 : index
      %c0_14 = arith.constant 0 : index
      %16 = vector.load %arg3[%c0_13, %c0_14] : memref<1x32xf32, #tpu.memory_space<vmem>>, vector<1x32xf32>
      %17 = vector.broadcast %16 : vector<1x32xf32> to vector<2x32xf32>
      %18 = arith.addf %15, %17 : vector<2x32xf32>
      %cst_15 = arith.constant 0.000000e+00 : f32
      %19 = vector.broadcast %cst_15 : f32 to vector<2x32xf32>
      %20 = arith.maximumf %18, %19 : vector<2x32xf32>
      %c0_16 = arith.constant 0 : index
      %c0_17 = arith.constant 0 : index
      %21 = vector.load %arg4[%c0_16, %c0_17] : memref<2x32xf32, #tpu.memory_space<vmem>>, vector<2x32xf32>
      tpu.vector_store %arg4[%c0_16, %c0_17], %20 {strides = array<i32>} : memref<2x32xf32, #tpu.memory_space<vmem>>, vector<2x32xf32>,
    } else {
    }
    return
  }
  func.func @transform_0(%arg0: i32) -> (i32, i32, i32) {
    %c0_i32 = arith.constant 0 : i32
    %c0_i32_0 = arith.constant 0 : i32
    %c0_i32_1 = arith.constant 0 : i32
    return %arg0, %c0_i32, %c0_i32_0 : i32, i32, i32
  }
  func.func @transform_1(%arg0: i32) -> (i32, i32, i32) {
    %c0_i32 = arith.constant 0 : i32
    %c0_i32_0 = arith.constant 0 : i32
    %c0_i32_1 = arith.constant 0 : i32
    return %arg0, %c0_i32, %c0_i32_0 : i32, i32, i32
  }
  func.func @transform_2(%arg0: i32) -> (i32, i32) {
    %c0_i32 = arith.constant 0 : i32
    %c0_i32_0 = arith.constant 0 : i32
    %c0_i32_1 = arith.constant 0 : i32
    return %c0_i32, %c0_i32_0 : i32, i32
  }
  func.func @transform_3(%arg0: i32) -> (i32, i32) {
    %c0_i32 = arith.constant 0 : i32
    %c0_i32_0 = arith.constant 0 : i32
    %c0_i32_1 = arith.constant 0 : i32
    return %c0_i32, %c0_i32_0 : i32, i32
  }
}

</mosaic_0001>

<llo_original>
// kernel: _lambda_.3
$region0: #{_lambda_.3}
  #allocation0 [shape = 'u32[]', space=smem, size = 0x4, offset = 0x4, fixed_abs, tag = 'smem constant byte address 0x4 - core index']
  #allocation1 [shape = 'u32[72,128]{1,0:T(1,128)}', space=vmem, size = 0x9000, scoped, tag = 'internal scratch']
  #allocation2 [shape = 'f32[4,1]{1,0:T(4,128)}', space=vmem, size = 0x800, scoped, tag = 'scratch operand']
  #allocation3 [shape = 'f32[4,1]{1,0:T(4,128)}', space=vmem, size = 0x800, scoped, tag = 'scratch operand']
  %s0 = inlined_call_operand.vmem [shape: bf16[32,128], index: 0, kind: input, shape index: {}]
  %s1 = inlined_call_operand.vmem [shape: bf16[4,32], index: 1, kind: input, shape index: {}]
  %s2 = inlined_call_operand.vmem [shape: f32[4,1], index: 2, kind: input, shape index: {}]
  %s3 = inlined_call_operand.vmem [shape: f32[4,1], index: 3, kind: input, shape index: {}]
  %s4 = inlined_call_operand.vmem [shape: f32[4,128], index: 4, kind: output, shape index: {}]
  %s5 = sld [smem:[#allocation0]]
  $region61: #{_lambda_.3} parent=0
    _
  %s7 = ssub.s32 1, %s5
  %s8 = scalar_select 0, %s7, %s5
  loop: start=0, step=1, limit=4
  $region2: #{_lambda_.3} parent=0 // loop_pre_header
    _
  $region3: #{_lambda_.3} parent=0 // loop_header
    %s10 = sphi 0, %s14
    %p11 = scmp.ge.s32.totalorder %s10, 4
    %s17 = sphi 0, %s29
    %s18 = sphi 0, %s25
    %s19 = sphi 0, %s17
    %s20 = sphi 0, %s18
    %s21 = sphi 0, %s19
    %s22 = sphi 0, %s20
    %s32 = sphi 0, %s34
    %s35 = sphi 0, %s32
    %s36 = sphi 0, %s35
    %s52 = sphi 0, %s36
    %s56 = sphi 0, %s56
    %s58 = sphi 0, %s56
    %s59 = sphi 0, %s58
    %s73 = sphi 0, %s59
    %s77 = sphi 0, %s77
    %s79 = sphi 0, %s77
    %s80 = sphi 0, %s79
    %s94 = sphi 0, %s80
    %s98 = sphi 0, %s98
    %s100 = sphi 0, %s98
    %s101 = sphi 0, %s100
    %s115 = sphi 0, %s101
    %s121 = sphi 0, %s123
    %s124 = sphi 0, %s121
    %s125 = sphi 0, %s124
    %s141 = sphi 0, %s125
  $region4: #{_lambda_.3} parent=0 // loop_header_branch
    %13 = sbr.rel (%p11) target = $region8
  $region5: #{_lambda_.3} parent=0 // loop_body
    %s15 = ssub.s32 %s10, 1
    %s16 = ssub.s32 %s10, 2
    %s23 = sadd.s32 1, %s18
    %p24 = scmp.ge.s32.totalorder %s23, 1
    %s25 = scalar_select %p24, 0, %s23
    %s26 = sadd.s32 1, %s17
    %s27 = scalar_select %p24, %s26, %s17
    %p28 = scmp.ge.s32.totalorder %s27, 2
    %s29 = scalar_select %p28, 0, %s27
    %s30 = ssub.s32 %s18, %s25
    %p31 = scmp.eq.s32.totalorder %s30, 0
    %s33 = sadd.s32 %s32, 1
    %s34 = scalar_select %p31, %s32, %s33
    %p37 = pneg %p31
    %p38 = scmp.eq.s32.totalorder %s10, 1
    %p39 = por %p37, %p38
    %p40 = scmp.ne.s32.totalorder %s32, %s35
    %p41 = scmp.eq.s32.totalorder %s10, 0
    %p42 = por %p40, %p41
    %p43 = scmp.ne.s32.totalorder %s32, %s35
    %p44 = scmp.eq.s32.totalorder %s15, 1
    %p45 = por %p43, %p44
    %p46 = scmp.ne.s32.totalorder %s35, %s36
    %p47 = scmp.eq.s32.totalorder %s15, 0
    %p48 = por %p46, %p47
    %p49 = scmp.ne.s32.totalorder %s35, %s36
    %p50 = scmp.eq.s32.totalorder %s16, 1
    %p51 = por %p49, %p50
    %p53 = scmp.ne.s32.totalorder %s36, %s52
    %p54 = scmp.eq.s32.totalorder %s16, 0
    %p55 = por %p53, %p54
    %s57 = sadd.s32 %s56, 1
    %p60 = scmp.eq.s32.totalorder %s10, 1
    %p61 = scmp.ne.s32.totalorder %s56, %s58
    %p62 = scmp.eq.s32.totalorder %s10, 0
    %p63 = por %p61, %p62
    %p64 = scmp.ne.s32.totalorder %s56, %s58
    %p65 = scmp.eq.s32.totalorder %s15, 1
    %p66 = por %p64, %p65
    %p67 = scmp.ne.s32.totalorder %s58, %s59
    %p68 = scmp.eq.s32.totalorder %s15, 0
    %p69 = por %p67, %p68
    %p70 = scmp.ne.s32.totalorder %s58, %s59
    %p71 = scmp.eq.s32.totalorder %s16, 1
    %p72 = por %p70, %p71
    %p74 = scmp.ne.s32.totalorder %s59, %s73
    %p75 = scmp.eq.s32.totalorder %s16, 0
    %p76 = por %p74, %p75
    %s78 = sadd.s32 %s77, 1
    %p81 = scmp.eq.s32.totalorder %s10, 1
    %p82 = scmp.ne.s32.totalorder %s77, %s79
    %p83 = scmp.eq.s32.totalorder %s10, 0
    %p84 = por %p82, %p83
    %p85 = scmp.ne.s32.totalorder %s77, %s79
    %p86 = scmp.eq.s32.totalorder %s15, 1
    %p87 = por %p85, %p86
    %p88 = scmp.ne.s32.totalorder %s79, %s80
    %p89 = scmp.eq.s32.totalorder %s15, 0
    %p90 = por %p88, %p89
    %p91 = scmp.ne.s32.totalorder %s79, %s80
    %p92 = scmp.eq.s32.totalorder %s16, 1
    %p93 = por %p91, %p92
    %p95 = scmp.ne.s32.totalorder %s80, %s94
    %p96 = scmp.eq.s32.totalorder %s16, 0
    %p97 = por %p95, %p96
    %s99 = sadd.s32 %s98, 1
    %p102 = scmp.eq.s32.totalorder %s10, 1
    %p103 = scmp.ne.s32.totalorder %s98, %s100
    %p104 = scmp.eq.s32.totalorder %s10, 0
    %p105 = por %p103, %p104
    %p106 = scmp.ne.s32.totalorder %s98, %s100
    %p107 = scmp.eq.s32.totalorder %s15, 1
    %p108 = por %p106, %p107
    %p109 = scmp.ne.s32.totalorder %s100, %s101
    %p110 = scmp.eq.s32.totalorder %s15, 0
    %p111 = por %p109, %p110
    %p112 = scmp.ne.s32.totalorder %s100, %s101
    %p113 = scmp.eq.s32.totalorder %s16, 1
    %p114 = por %p112, %p113
    %p116 = scmp.ne.s32.totalorder %s101, %s115
    %p117 = scmp.eq.s32.totalorder %s16, 0
    %p118 = por %p116, %p117
    %s119 = ssub.s32 %s18, %s25
    %p120 = scmp.eq.s32.totalorder %s119, 0
    %s122 = sadd.s32 %s121, 1
    %s123 = scalar_select %p120, %s121, %s122
    %p126 = pneg %p120
    %p127 = scmp.eq.s32.totalorder %s10, 1
    %p128 = por %p126, %p127
    %p129 = scmp.ne.s32.totalorder %s121, %s124
    %p130 = scmp.eq.s32.totalorder %s10, 0
    %p131 = por %p129, %p130
    %p132 = scmp.ne.s32.totalorder %s121, %s124
    %p133 = scmp.eq.s32.totalorder %s15, 1
    %p134 = por %p132, %p133
    %p135 = scmp.ne.s32.totalorder %s124, %s125
    %p136 = scmp.eq.s32.totalorder %s15, 0
    %p137 = por %p135, %p136
    %p138 = scmp.ne.s32.totalorder %s124, %s125
    %p139 = scmp.eq.s32.totalorder %s16, 1
    %p140 = por %p138, %p139
    %p142 = scmp.ne.s32.totalorder %s125, %s141
    %p143 = scmp.eq.s32.totalorder %s16, 0
    %p144 = por %p142, %p143
    %p145 = scmp.le.s32.totalorder 1, %s10
    %p146 = scmp.lt.s32.totalorder %s10, 3
    %p147 = pnand %p145, %p146
    %p148 = pneg %p147
    // Predicated region
    $region9: #{_lambda_.3} parent=5 // pred_check
      _
    $region10: #{_lambda_.3} parent=5 // pred_check_branch
      %150 = sbr.rel (%p147) target = $region12
    $region11: #{_lambda_.3} parent=5 // pred_region
      %s151 = ssub.s32 %s10, 1
      // Predicated region
      $region13: #{_lambda_.3} parent=11 // pred_check
        %p152 = pneg %p48
      $region14: #{_lambda_.3} parent=11 // pred_check_branch
        %154 = sbr.rel (%p152) target = $region16
      $region15: #{_lambda_.3} parent=11 // pred_region
        %p155 = scmp.lt.s32.totalorder %s20, 0
        %s156 = scalar_select %p155, %s20, 0
        %s157 = smul.addr %s156, 4
        %s158 = scalar_lea.vmem %s0, %s157
      $region16: #{_lambda_.3} parent=11 // pred_fallthru
        _
      // Predicated region
      $region17: #{_lambda_.3} parent=11 // pred_check
        %p159 = pneg %p69
      $region18: #{_lambda_.3} parent=11 // pred_check_branch
        %161 = sbr.rel (%p159) target = $region20
      $region19: #{_lambda_.3} parent=11 // pred_region
        _
      $region20: #{_lambda_.3} parent=11 // pred_fallthru
        _
      // Predicated region
      $region21: #{_lambda_.3} parent=11 // pred_check
        %p162 = pneg %p90
      $region22: #{_lambda_.3} parent=11 // pred_check_branch
        %164 = sbr.rel (%p162) target = $region24
      $region23: #{_lambda_.3} parent=11 // pred_region
        _
      $region24: #{_lambda_.3} parent=11 // pred_fallthru
        _
      // Predicated region
      $region25: #{_lambda_.3} parent=11 // pred_check
        %p165 = pneg %p111
      $region26: #{_lambda_.3} parent=11 // pred_check_branch
        %167 = sbr.rel (%p165) target = $region28
      $region27: #{_lambda_.3} parent=11 // pred_region
        _
      $region28: #{_lambda_.3} parent=11 // pred_fallthru
        _
    $region12: #{_lambda_.3} parent=5 // pred_fallthru
      _
    %p168 = scmp.lt.s32.totalorder %s10, 2
    // Predicated region
    $region29: #{_lambda_.3} parent=5 // pred_check
      %p169 = pneg %p168
    $region30: #{_lambda_.3} parent=5 // pred_check_branch
      %171 = sbr.rel (%p169) target = $region32
    $region31: #{_lambda_.3} parent=5 // pred_region
      _
    $region32: #{_lambda_.3} parent=5 // pred_fallthru
      _
    %p172 = scmp.le.s32.totalorder 1, %s10
    %p173 = scmp.lt.s32.totalorder %s10, 3
    %p174 = pnand %p172, %p173
    %p175 = pneg %p174
    // Predicated region
    $region33: #{_lambda_.3} parent=5 // pred_check
      _
    $region34: #{_lambda_.3} parent=5 // pred_check_branch
      %177 = sbr.rel (%p174) target = $region36
    $region35: #{_lambda_.3} parent=5 // pred_region
      %s178 = ssub.s32 %s10, 1
      %p179 = scmp.lt.s32.totalorder %s20, 0
      %s180 = scalar_select %p179, %s20, 0
      %s181 = smul.addr %s180, 4
      %s182 = scalar_lea.vmem %s0, %s181
      %p183 = pneg %p48
      %p184 = pneg %p45
      %p185 = pneg %p69
      %p186 = pneg %p66
      %p187 = pneg %p90
      %p188 = pneg %p87
      %p189 = pneg %p111
      %p190 = pneg %p108
      %p191 = pneg %p137
      %p192 = pneg %p134
      %p193 = scmp.lt.s32.totalorder %s20, 0
      %s194 = scalar_select %p193, %s20, 0
      %s195 = smul.addr %s194, 4
      %s196 = scalar_lea.vmem %s4, %s195
      %p197 = scmp.lt.s32.totalorder %s20, 0
      %s198 = scalar_select %p197, %s20, 0
      %s199 = smul.addr %s198, 4
      %s200 = scalar_lea.vmem %s0, %s199
      %p201 = scmp.lt.s32.totalorder %s20, 0
      %s202 = scalar_select %p201, %s20, 0
      %s203 = smul.addr %s202, 4
      %s204 = scalar_lea.vmem %s4, %s203
      %p206 = scmp.eq.s32.totalorder %s19, 0
      %p207 = scmp.eq.s32.totalorder %s20, 0
      %p208 = pnand %p206, %p207
      %p209 = pneg %p208
      // Predicated region
      $region37: #{_lambda_.3} parent=35 // pred_check
        _
      $region38: #{_lambda_.3} parent=35 // pred_check_branch
        %211 = sbr.rel (%p208) target = $region40
      $region39: #{_lambda_.3} parent=35 // pred_region
        %vm212 = vcmask 3072
        %213 = vst.msk [vmem:[#allocation2] sm:$0xf] %vm212, 0.0
        %214 = vst.msk [vmem:[#allocation3] sm:$0xf] %vm212, 0.0
      $region40: #{_lambda_.3} parent=35 // pred_fallthru
        _
      %v215 = vld [vmem:[%s1] sm:$0x3]
      %v216 = vld [vmem:[%s200] sm:$0xf]
      %v217 = vld [vmem:[%s200 + $0x4] sm:$0xf]
      %v218 = vld [vmem:[%s200 + $0x8] sm:$0xf]
      %v219 = vld [vmem:[%s200 + $0xc] sm:$0xf]
      %v224 = vunpack.c.l.b16 %v216
      %v225 = vunpack.c.l.b16 %v217
      %v226 = vunpack.c.l.b16 %v218
      %v227 = vunpack.c.l.b16 %v219
      %v228 = vpack.c.b16 %v225, %v224
      %v229 = vpack.c.b16 %v227, %v226
      %vm232 = vcmask 261120
      %v234 = vsel %vm232, %v215, 0
      %236 = vmatpush.bf16.msra.mxu0 0
      %237 = vmatpush.bf16.msra.mxu0 0
      %238 = vmatpush.bf16.msra.mxu0 0
      %239 = vmatpush.bf16.msra.mxu0 0
      %240 = vmatpush.bf16.msra.mxu0 0
      %241 = vmatpush.bf16.msra.mxu0 0
      %242 = vmatpush.bf16.msra.mxu0 %v229
      %243 = vmatpush.bf16.msra.mxu0 %v228
      %244 = vmatmul.bf16.gmra.mxu0 %v234
      %v245 = vpop.f32.mrf.mxu0
      %v246 = vadd.f32 0.0, %v245
      %v247 = vpop.f32.mrf.mxu0
      %248 = vdwg.mxu0
      // Predicated region
      $region41: #{_lambda_.3} parent=35 // pred_check
        %p249 = pneg %p206
      $region42: #{_lambda_.3} parent=35 // pred_check_branch
        %251 = sbr.rel (%p249) target = $region44
      $region43: #{_lambda_.3} parent=35 // pred_region
        %v252 = vld [vmem:[#allocation2] sm:$0xf]
        %vm253 = vcmask 1043456
        %v254 = vsel %vm253, %v246, 0.0
        %255 = vadd.xlane.f32.xlu0 %v254
        %v256 = vpop.xlane.xlu0 %255
        %v257 = vadd.f32 %v252, %v256
        %vm258 = vcmask 3072
        %259 = vst.msk [vmem:[#allocation2] sm:$0xf] %vm258, %v257
        %v260 = vld [vmem:[#allocation3] sm:$0xf]
        %v261 = vmul.f32 %v246, %v246
        %v262 = vsel %vm253, %v261, 0.0
        %263 = vadd.xlane.f32.xlu0 %v262
        %v264 = vpop.xlane.xlu0 %263
        %v265 = vadd.f32 %v260, %v264
        %266 = vst.msk [vmem:[#allocation3] sm:$0xf] %vm258, %v265
        %267 = vst [vmem:[%s204] sm:$0xf] %v246
      $region44: #{_lambda_.3} parent=35 // pred_fallthru
        _
      %p268 = scmp.eq.s32.totalorder %s19, 1
      // Predicated region
      $region45: #{_lambda_.3} parent=35 // pred_check
        %p269 = pneg %p268
      $region46: #{_lambda_.3} parent=35 // pred_check_branch
        %271 = sbr.rel (%p269) target = $region48
      $region47: #{_lambda_.3} parent=35 // pred_region
        %v272 = vld [vmem:[#allocation2] sm:$0xf]
        %v273 = vmul.f32 %v272, 0.010204081
        %v274 = vld [vmem:[#allocation3] sm:$0xf]
        %v275 = vmul.f32 %v274, 0.010204081
        %v276 = vmul.f32 %v273, %v273
        %v277 = vsub.f32 %v275, %v276
        %v278 = vmax.f32 %v277, 0.0
        %v279 = vadd.f32 %v278, 1e-05
        %v280 = vrsqrt.pop %v279
        %v281 = vmul.f32 %v280, %v279
        %v282 = vmul.f32 %v281, %v280
        %v283 = vmul.f32 0.5, %v282
        %v284 = vsub.f32 1.5, %v283
        %v285 = vmul.f32 %v280, %v284
        %vm286 = vweird.f32 %v279
        %vm287 = vweird.f32 %v280
        %vm288 = vmor %vm286, %vm287
        %v289 = vsel %vm288, %v280, %v285
        %291 = vset.pattern.permute.xlu0 0
        %292 = vperm.xlu0 %291, %v273
        %v293 = vpop.permute.xlu0 %292
        %v295 = vsub.f32 %v246, %v293
        %297 = vset.pattern.permute.xlu0 0
        %298 = vperm.xlu0 %297, %v289
        %v299 = vpop.permute.xlu0 %298
        %v301 = vmul.f32 %v295, %v299
        %v302 = vld [vmem:[%s2] sm:$0xf]
        %304 = vset.pattern.permute.xlu0 0
        %305 = vperm.xlu0 %304, %v302
        %v306 = vpop.permute.xlu0 %305
        %v308 = vmul.f32 %v301, %v306
        %v309 = vld [vmem:[%s3] sm:$0xf]
        %311 = vset.pattern.permute.xlu0 0
        %312 = vperm.xlu0 %311, %v309
        %v313 = vpop.permute.xlu0 %312
        %v315 = vadd.f32 %v308, %v313
        %v316 = vmax.f32 %v315, 0.0
        %317 = vst [vmem:[%s204] sm:$0xf] %v316
      $region48: #{_lambda_.3} parent=35 // pred_fallthru
        _
      %p318 = scmp.lt.s32.totalorder %s20, 0
      %s319 = scalar_select %p318, %s20, 0
      %s320 = smul.addr %s319, 4
      %s321 = scalar_lea.vmem %s4, %s320
      // Predicated region
      $region49: #{_lambda_.3} parent=35 // pred_check
        %p322 = pneg %p134
      $region50: #{_lambda_.3} parent=35 // pred_check_branch
        %324 = sbr.rel (%p322) target = $region52
      $region51: #{_lambda_.3} parent=35 // pred_region
        _
      $region52: #{_lambda_.3} parent=35 // pred_fallthru
        _
      // Predicated region
      $region53: #{_lambda_.3} parent=35 // pred_check
        %p325 = pneg %p134
      $region54: #{_lambda_.3} parent=35 // pred_check_branch
        %327 = sbr.rel (%p325) target = $region56
      $region55: #{_lambda_.3} parent=35 // pred_region
        %p328 = scmp.lt.s32.totalorder %s20, 0
        %s329 = scalar_select %p328, %s20, 0
        %s330 = smul.addr %s329, 4
        %s331 = scalar_lea.vmem %s4, %s330
      $region56: #{_lambda_.3} parent=35 // pred_fallthru
        _
    $region36: #{_lambda_.3} parent=5 // pred_fallthru
      _
    %p332 = scmp.le.s32.totalorder 2, %s10
    // Predicated region
    $region57: #{_lambda_.3} parent=5 // pred_check
      %p333 = pneg %p332
    $region58: #{_lambda_.3} parent=5 // pred_check_branch
      %335 = sbr.rel (%p333) target = $region60
    $region59: #{_lambda_.3} parent=5 // pred_region
      %s336 = ssub.s32 %s10, 2
    $region60: #{_lambda_.3} parent=5 // pred_fallthru
      _
  $region6: #{_lambda_.3} parent=0 // loop_footer
    %s14 = sadd.s32 1, %s10
  $region7: #{_lambda_.3} parent=0 // loop_footer_branch
    %9 = sbr.rel target = $region3
  $region8: #{_lambda_.3} parent=0 // loop_exit
    _

// kernel: _lambda_.4
$region0: #{_lambda_.4}
  #allocation0 [shape = 'u32[]', space=smem, size = 0x4, offset = 0x4, fixed_abs, tag = 'smem constant byte address 0x4 - core index']
  #allocation1 [shape = 'u32[72,128]{1,0:T(1,128)}', space=vmem, size = 0x9000, scoped, tag = 'internal scratch']
  #allocation2 [shape = 'f32[8,1]{1,0:T(8,128)}', space=vmem, size = 0x1000, scoped, tag = 'scratch operand']
  #allocation3 [shape = 'f32[8,1]{1,0:T(8,128)}', space=vmem, size = 0x1000, scoped, tag = 'scratch operand']
  %s0 = inlined_call_operand.vmem [shape: bf16[40,128], index: 0, kind: input, shape index: {}]
  %s1 = inlined_call_operand.vmem [shape: bf16[8,40], index: 1, kind: input, shape index: {}]
  %s2 = inlined_call_operand.vmem [shape: f32[8,1], index: 2, kind: input, shape index: {}]
  %s3 = inlined_call_operand.vmem [shape: f32[8,1], index: 3, kind: input, shape index: {}]
  %s4 = inlined_call_operand.vmem [shape: f32[8,128], index: 4, kind: output, shape index: {}]
  %s5 = sld [smem:[#allocation0]]
  $region61: #{_lambda_.4} parent=0
    _
  %s7 = ssub.s32 1, %s5
  %s8 = scalar_select 0, %s7, %s5
  loop: start=0, step=1, limit=4
  $region2: #{_lambda_.4} parent=0 // loop_pre_header
    _
  $region3: #{_lambda_.4} parent=0 // loop_header
    %s10 = sphi 0, %s14
    %p11 = scmp.ge.s32.totalorder %s10, 4
    %s17 = sphi 0, %s29
    %s18 = sphi 0, %s25
    %s19 = sphi 0, %s17
    %s20 = sphi 0, %s18
    %s21 = sphi 0, %s19
    %s22 = sphi 0, %s20
    %s32 = sphi 0, %s34
    %s35 = sphi 0, %s32
    %s36 = sphi 0, %s35
    %s52 = sphi 0, %s36
    %s56 = sphi 0, %s56
    %s58 = sphi 0, %s56
    %s59 = sphi 0, %s58
    %s73 = sphi 0, %s59
    %s77 = sphi 0, %s77
    %s79 = sphi 0, %s77
    %s80 = sphi 0, %s79
    %s94 = sphi 0, %s80
    %s98 = sphi 0, %s98
    %s100 = sphi 0, %s98
    %s101 = sphi 0, %s100
    %s115 = sphi 0, %s101
    %s121 = sphi 0, %s123
    %s124 = sphi 0, %s121
    %s125 = sphi 0, %s124
    %s141 = sphi 0, %s125
  $region4: #{_lambda_.4} parent=0 // loop_header_branch
    %13 = sbr.rel (%p11) target = $region8
  $region5: #{_lambda_.4} parent=0 // loop_body
    %s15 = ssub.s32 %s10, 1
    %s16 = ssub.s32 %s10, 2
    %s23 = sadd.s32 1, %s18
    %p24 = scmp.ge.s32.totalorder %s23, 1
    %s25 = scalar_select %p24, 0, %s23
    %s26 = sadd.s32 1, %s17
    %s27 = scalar_select %p24, %s26, %s17
    %p28 = scmp.ge.s32.totalorder %s27, 2
    %s29 = scalar_select %p28, 0, %s27
    %s30 = ssub.s32 %s18, %s25
    %p31 = scmp.eq.s32.totalorder %s30, 0
    %s33 = sadd.s32 %s32, 1
    %s34 = scalar_select %p31, %s32, %s33
    %p37 = pneg %p31
    %p38 = scmp.eq.s32.totalorder %s10, 1
    %p39 = por %p37, %p38
    %p40 = scmp.ne.s32.totalorder %s32, %s35
    %p41 = scmp.eq.s32.totalorder %s10, 0
    %p42 = por %p40, %p41
    %p43 = scmp.ne.s32.totalorder %s32, %s35
    %p44 = scmp.eq.s32.totalorder %s15, 1
    %p45 = por %p43, %p44
    %p46 = scmp.ne.s32.totalorder %s35, %s36
    %p47 = scmp.eq.s32.totalorder %s15, 0
    %p48 = por %p46, %p47
    %p49 = scmp.ne.s32.totalorder %s35, %s36
    %p50 = scmp.eq.s32.totalorder %s16, 1
    %p51 = por %p49, %p50
    %p53 = scmp.ne.s32.totalorder %s36, %s52
    %p54 = scmp.eq.s32.totalorder %s16, 0
    %p55 = por %p53, %p54
    %s57 = sadd.s32 %s56, 1
    %p60 = scmp.eq.s32.totalorder %s10, 1
    %p61 = scmp.ne.s32.totalorder %s56, %s58
    %p62 = scmp.eq.s32.totalorder %s10, 0
    %p63 = por %p61, %p62
    %p64 = scmp.ne.s32.totalorder %s56, %s58
    %p65 = scmp.eq.s32.totalorder %s15, 1
    %p66 = por %p64, %p65
    %p67 = scmp.ne.s32.totalorder %s58, %s59
    %p68 = scmp.eq.s32.totalorder %s15, 0
    %p69 = por %p67, %p68
    %p70 = scmp.ne.s32.totalorder %s58, %s59
    %p71 = scmp.eq.s32.totalorder %s16, 1
    %p72 = por %p70, %p71
    %p74 = scmp.ne.s32.totalorder %s59, %s73
    %p75 = scmp.eq.s32.totalorder %s16, 0
    %p76 = por %p74, %p75
    %s78 = sadd.s32 %s77, 1
    %p81 = scmp.eq.s32.totalorder %s10, 1
    %p82 = scmp.ne.s32.totalorder %s77, %s79
    %p83 = scmp.eq.s32.totalorder %s10, 0
    %p84 = por %p82, %p83
    %p85 = scmp.ne.s32.totalorder %s77, %s79
    %p86 = scmp.eq.s32.totalorder %s15, 1
    %p87 = por %p85, %p86
    %p88 = scmp.ne.s32.totalorder %s79, %s80
    %p89 = scmp.eq.s32.totalorder %s15, 0
    %p90 = por %p88, %p89
    %p91 = scmp.ne.s32.totalorder %s79, %s80
    %p92 = scmp.eq.s32.totalorder %s16, 1
    %p93 = por %p91, %p92
    %p95 = scmp.ne.s32.totalorder %s80, %s94
    %p96 = scmp.eq.s32.totalorder %s16, 0
    %p97 = por %p95, %p96
    %s99 = sadd.s32 %s98, 1
    %p102 = scmp.eq.s32.totalorder %s10, 1
    %p103 = scmp.ne.s32.totalorder %s98, %s100
    %p104 = scmp.eq.s32.totalorder %s10, 0
    %p105 = por %p103, %p104
    %p106 = scmp.ne.s32.totalorder %s98, %s100
    %p107 = scmp.eq.s32.totalorder %s15, 1
    %p108 = por %p106, %p107
    %p109 = scmp.ne.s32.totalorder %s100, %s101
    %p110 = scmp.eq.s32.totalorder %s15, 0
    %p111 = por %p109, %p110
    %p112 = scmp.ne.s32.totalorder %s100, %s101
    %p113 = scmp.eq.s32.totalorder %s16, 1
    %p114 = por %p112, %p113
    %p116 = scmp.ne.s32.totalorder %s101, %s115
    %p117 = scmp.eq.s32.totalorder %s16, 0
    %p118 = por %p116, %p117
    %s119 = ssub.s32 %s18, %s25
    %p120 = scmp.eq.s32.totalorder %s119, 0
    %s122 = sadd.s32 %s121, 1
    %s123 = scalar_select %p120, %s121, %s122
    %p126 = pneg %p120
    %p127 = scmp.eq.s32.totalorder %s10, 1
    %p128 = por %p126, %p127
    %p129 = scmp.ne.s32.totalorder %s121, %s124
    %p130 = scmp.eq.s32.totalorder %s10, 0
    %p131 = por %p129, %p130
    %p132 = scmp.ne.s32.totalorder %s121, %s124
    %p133 = scmp.eq.s32.totalorder %s15, 1
    %p134 = por %p132, %p133
    %p135 = scmp.ne.s32.totalorder %s124, %s125
    %p136 = scmp.eq.s32.totalorder %s15, 0
    %p137 = por %p135, %p136
    %p138 = scmp.ne.s32.totalorder %s124, %s125
    %p139 = scmp.eq.s32.totalorder %s16, 1
    %p140 = por %p138, %p139
    %p142 = scmp.ne.s32.totalorder %s125, %s141
    %p143 = scmp.eq.s32.totalorder %s16, 0
    %p144 = por %p142, %p143
    %p145 = scmp.le.s32.totalorder 1, %s10
    %p146 = scmp.lt.s32.totalorder %s10, 3
    %p147 = pnand %p145, %p146
    %p148 = pneg %p147
    // Predicated region
    $region9: #{_lambda_.4} parent=5 // pred_check
      _
    $region10: #{_lambda_.4} parent=5 // pred_check_branch
      %150 = sbr.rel (%p147) target = $region12
    $region11: #{_lambda_.4} parent=5 // pred_region
      %s151 = ssub.s32 %s10, 1
      // Predicated region
      $region13: #{_lambda_.4} parent=11 // pred_check
        %p152 = pneg %p48
      $region14: #{_lambda_.4} parent=11 // pred_check_branch
        %154 = sbr.rel (%p152) target = $region16
      $region15: #{_lambda_.4} parent=11 // pred_region
        %p155 = scmp.lt.s32.totalorder %s20, 0
        %s156 = scalar_select %p155, %s20, 0
        %s157 = smul.addr %s156, 4
        %s158 = scalar_lea.vmem %s0, %s157
      $region16: #{_lambda_.4} parent=11 // pred_fallthru
        _
      // Predicated region
      $region17: #{_lambda_.4} parent=11 // pred_check
        %p159 = pneg %p69
      $region18: #{_lambda_.4} parent=11 // pred_check_branch
        %161 = sbr.rel (%p159) target = $region20
      $region19: #{_lambda_.4} parent=11 // pred_region
        _
      $region20: #{_lambda_.4} parent=11 // pred_fallthru
        _
      // Predicated region
      $region21: #{_lambda_.4} parent=11 // pred_check
        %p162 = pneg %p90
      $region22: #{_lambda_.4} parent=11 // pred_check_branch
        %164 = sbr.rel (%p162) target = $region24
      $region23: #{_lambda_.4} parent=11 // pred_region
        _
      $region24: #{_lambda_.4} parent=11 // pred_fallthru
        _
      // Predicated region
      $region25: #{_lambda_.4} parent=11 // pred_check
        %p165 = pneg %p111
      $region26: #{_lambda_.4} parent=11 // pred_check_branch
        %167 = sbr.rel (%p165) target = $region28
      $region27: #{_lambda_.4} parent=11 // pred_region
        _
      $region28: #{_lambda_.4} parent=11 // pred_fallthru
        _
    $region12: #{_lambda_.4} parent=5 // pred_fallthru
      _
    %p168 = scmp.lt.s32.totalorder %s10, 2
    // Predicated region
    $region29: #{_lambda_.4} parent=5 // pred_check
      %p169 = pneg %p168
    $region30: #{_lambda_.4} parent=5 // pred_check_branch
      %171 = sbr.rel (%p169) target = $region32
    $region31: #{_lambda_.4} parent=5 // pred_region
      _
    $region32: #{_lambda_.4} parent=5 // pred_fallthru
      _
    %p172 = scmp.le.s32.totalorder 1, %s10
    %p173 = scmp.lt.s32.totalorder %s10, 3
    %p174 = pnand %p172, %p173
    %p175 = pneg %p174
    // Predicated region
    $region33: #{_lambda_.4} parent=5 // pred_check
      _
    $region34: #{_lambda_.4} parent=5 // pred_check_branch
      %177 = sbr.rel (%p174) target = $region36
    $region35: #{_lambda_.4} parent=5 // pred_region
      %s178 = ssub.s32 %s10, 1
      %p179 = scmp.lt.s32.totalorder %s20, 0
      %s180 = scalar_select %p179, %s20, 0
      %s181 = smul.addr %s180, 4
      %s182 = scalar_lea.vmem %s0, %s181
      %p183 = pneg %p48
      %p184 = pneg %p45
      %p185 = pneg %p69
      %p186 = pneg %p66
      %p187 = pneg %p90
      %p188 = pneg %p87
      %p189 = pneg %p111
      %p190 = pneg %p108
      %p191 = pneg %p137
      %p192 = pneg %p134
      %p193 = scmp.lt.s32.totalorder %s20, 0
      %s194 = scalar_select %p193, %s20, 0
      %s195 = smul.addr %s194, 8
      %s196 = scalar_lea.vmem %s4, %s195
      %p197 = scmp.lt.s32.totalorder %s20, 0
      %s198 = scalar_select %p197, %s20, 0
      %s199 = smul.addr %s198, 4
      %s200 = scalar_lea.vmem %s0, %s199
      %p201 = scmp.lt.s32.totalorder %s20, 0
      %s202 = scalar_select %p201, %s20, 0
      %s203 = smul.addr %s202, 8
      %s204 = scalar_lea.vmem %s4, %s203
      %p206 = scmp.eq.s32.totalorder %s19, 0
      %p207 = scmp.eq.s32.totalorder %s20, 0
      %p208 = pnand %p206, %p207
      %p209 = pneg %p208
      // Predicated region
      $region37: #{_lambda_.4} parent=35 // pred_check
        _
      $region38: #{_lambda_.4} parent=35 // pred_check_branch
        %211 = sbr.rel (%p208) target = $region40
      $region39: #{_lambda_.4} parent=35 // pred_region
        %vm212 = vcmask 7168
        %213 = vst.msk [vmem:[#allocation2] sm:$0xff] %vm212, 0.0
        %214 = vst.msk [vmem:[#allocation3] sm:$0xff] %vm212, 0.0
      $region40: #{_lambda_.4} parent=35 // pred_fallthru
        _
      %v215 = vld [vmem:[%s1] sm:$0xf]
      %v216 = vld [vmem:[%s200] sm:$0xf]
      %v217 = vld [vmem:[%s200 + $0x4] sm:$0xf]
      %v218 = vld [vmem:[%s200 + $0x8] sm:$0xf]
      %v219 = vld [vmem:[%s200 + $0xc] sm:$0xf]
      %v220 = vld [vmem:[%s200 + $0x10] sm:$0xf]
      %v226 = vunpack.c.l.b16 %v216
      %v227 = vunpack.c.l.b16 %v217
      %v228 = vunpack.c.l.b16 %v218
      %v229 = vunpack.c.l.b16 %v219
      %v230 = vunpack.c.l.b16 %v220
      %v231 = vpack.c.b16 %v227, %v226
      %v232 = vpack.c.b16 %v229, %v228
      %v233 = vpack.c.b16 %v230, %v230
      %vm236 = vcmask 326656
      %v238 = vsel %vm236, %v215, 0
      %vm240 = vcmask 1043456
      %v242 = vsel %vm240, %v233, 0
      %244 = vmatpush.bf16.msra.mxu0 0
      %245 = vmatpush.bf16.msra.mxu0 0
      %246 = vmatpush.bf16.msra.mxu0 0
      %247 = vmatpush.bf16.msra.mxu0 0
      %248 = vmatpush.bf16.msra.mxu0 0
      %249 = vmatpush.bf16.msra.mxu0 %v242
      %250 = vmatpush.bf16.msra.mxu0 %v232
      %251 = vmatpush.bf16.msra.mxu0 %v231
      %252 = vmatmul.bf16.gmra.mxu0 %v238
      %v253 = vpop.f32.mrf.mxu0
      %v254 = vadd.f32 0.0, %v253
      %v255 = vpop.f32.mrf.mxu0
      %256 = vdwg.mxu0
      // Predicated region
      $region41: #{_lambda_.4} parent=35 // pred_check
        %p257 = pneg %p206
      $region42: #{_lambda_.4} parent=35 // pred_check_branch
        %259 = sbr.rel (%p257) target = $region44
      $region43: #{_lambda_.4} parent=35 // pred_region
        %v260 = vld [vmem:[#allocation2] sm:$0xff]
        %261 = vadd.xlane.f32.xlu0 %v254
        %v262 = vpop.xlane.xlu0 %261
        %v263 = vadd.f32 %v260, %v262
        %vm264 = vcmask 7168
        %265 = vst.msk [vmem:[#allocation2] sm:$0xff] %vm264, %v263
        %v266 = vld [vmem:[#allocation3] sm:$0xff]
        %v267 = vmul.f32 %v254, %v254
        %268 = vadd.xlane.f32.xlu0 %v267
        %v269 = vpop.xlane.xlu0 %268
        %v270 = vadd.f32 %v266, %v269
        %271 = vst.msk [vmem:[#allocation3] sm:$0xff] %vm264, %v270
        %272 = vst [vmem:[%s204] sm:$0xff] %v254
      $region44: #{_lambda_.4} parent=35 // pred_fallthru
        _
      %p273 = scmp.eq.s32.totalorder %s19, 1
      // Predicated region
      $region45: #{_lambda_.4} parent=35 // pred_check
        %p274 = pneg %p273
      $region46: #{_lambda_.4} parent=35 // pred_check_branch
        %276 = sbr.rel (%p274) target = $region48
      $region47: #{_lambda_.4} parent=35 // pred_region
        %v277 = vld [vmem:[#allocation2] sm:$0xff]
        %v278 = vmul.f32 %v277, 0.055555556
        %v279 = vld [vmem:[#allocation3] sm:$0xff]
        %v280 = vmul.f32 %v279, 0.055555556
        %v281 = vmul.f32 %v278, %v278
        %v282 = vsub.f32 %v280, %v281
        %v283 = vmax.f32 %v282, 0.0
        %v284 = vadd.f32 %v283, 1e-05
        %v285 = vrsqrt.pop %v284
        %v286 = vmul.f32 %v285, %v284
        %v287 = vmul.f32 %v286, %v285
        %v288 = vmul.f32 0.5, %v287
        %v289 = vsub.f32 1.5, %v288
        %v290 = vmul.f32 %v285, %v289
        %vm291 = vweird.f32 %v284
        %vm292 = vweird.f32 %v285
        %vm293 = vmor %vm291, %vm292
        %v294 = vsel %vm293, %v285, %v290
        %296 = vset.pattern.permute.xlu0 0
        %297 = vperm.xlu0 %296, %v278
        %v298 = vpop.permute.xlu0 %297
        %v300 = vsub.f32 %v254, %v298
        %302 = vset.pattern.permute.xlu0 0
        %303 = vperm.xlu0 %302, %v294
        %v304 = vpop.permute.xlu0 %303
        %v306 = vmul.f32 %v300, %v304
        %v307 = vld [vmem:[%s2] sm:$0xff]
        %309 = vset.pattern.permute.xlu0 0
        %310 = vperm.xlu0 %309, %v307
        %v311 = vpop.permute.xlu0 %310
        %v313 = vmul.f32 %v306, %v311
        %v314 = vld [vmem:[%s3] sm:$0xff]
        %316 = vset.pattern.permute.xlu0 0
        %317 = vperm.xlu0 %316, %v314
        %v318 = vpop.permute.xlu0 %317
        %v320 = vadd.f32 %v313, %v318
        %v321 = vmax.f32 %v320, 0.0
        %322 = vst [vmem:[%s204] sm:$0xff] %v321
      $region48: #{_lambda_.4} parent=35 // pred_fallthru
        _
      %p323 = scmp.lt.s32.totalorder %s20, 0
      %s324 = scalar_select %p323, %s20, 0
      %s325 = smul.addr %s324, 8
      %s326 = scalar_lea.vmem %s4, %s325
      // Predicated region
      $region49: #{_lambda_.4} parent=35 // pred_check
        %p327 = pneg %p134
      $region50: #{_lambda_.4} parent=35 // pred_check_branch
        %329 = sbr.rel (%p327) target = $region52
      $region51: #{_lambda_.4} parent=35 // pred_region
        _
      $region52: #{_lambda_.4} parent=35 // pred_fallthru
        _
      // Predicated region
      $region53: #{_lambda_.4} parent=35 // pred_check
        %p330 = pneg %p134
      $region54: #{_lambda_.4} parent=35 // pred_check_branch
        %332 = sbr.rel (%p330) target = $region56
      $region55: #{_lambda_.4} parent=35 // pred_region
        %p333 = scmp.lt.s32.totalorder %s20, 0
        %s334 = scalar_select %p333, %s20, 0
        %s335 = smul.addr %s334, 8
        %s336 = scalar_lea.vmem %s4, %s335
      $region56: #{_lambda_.4} parent=35 // pred_fallthru
        _
    $region36: #{_lambda_.4} parent=5 // pred_fallthru
      _
    %p337 = scmp.le.s32.totalorder 2, %s10
    // Predicated region
    $region57: #{_lambda_.4} parent=5 // pred_check
      %p338 = pneg %p337
    $region58: #{_lambda_.4} parent=5 // pred_check_branch
      %340 = sbr.rel (%p338) target = $region60
    $region59: #{_lambda_.4} parent=5 // pred_region
      %s341 = ssub.s32 %s10, 2
    $region60: #{_lambda_.4} parent=5 // pred_fallthru
      _
  $region6: #{_lambda_.4} parent=0 // loop_footer
    %s14 = sadd.s32 1, %s10
  $region7: #{_lambda_.4} parent=0 // loop_footer_branch
    %9 = sbr.rel target = $region3
  $region8: #{_lambda_.4} parent=0 // loop_exit
    _

// kernel: _lambda_.5
$region0: #{_lambda_.5}
  #allocation0 [shape = 'u32[]', space=smem, size = 0x4, offset = 0x4, fixed_abs, tag = 'smem constant byte address 0x4 - core index']
  #allocation1 [shape = 'u32[72,128]{1,0:T(1,128)}', space=vmem, size = 0x9000, scoped, tag = 'internal scratch']
  #allocation2 [shape = 'f32[2,32]{1,0:T(2,128)}', space=vmem, size = 0x400, scoped, tag = 'scratch operand']
  %s0 = inlined_call_operand.vmem [shape: f32[8,2,9], index: 0, kind: input, shape index: {}]
  %s1 = inlined_call_operand.vmem [shape: bf16[8,32,9], index: 1, kind: input, shape index: {}]
  %s2 = inlined_call_operand.vmem [shape: f32[1,32], index: 2, kind: input, shape index: {}]
  %s3 = inlined_call_operand.hbm [shape: f32[2,32], index: 3, kind: output, shape index: {}]
  %s4 = sld [smem:[#allocation0]]
  $region53: #{_lambda_.5} parent=0
    _
  %s6 = ssub.s32 1, %s4
  %s7 = scalar_select 0, %s6, %s4
  $region1: #{_lambda_.5} parent=0
    #allocation3 [shape = 'u8[1024]{0}', space=vmem, size = 0x400, scoped, tag = 'output window, operand 0, single buffered']
    #allocation4 [shape = 's32[2]{0}', space=sflag, size = 0x8, scoped, tag = 'scoped memory for _lambda_.5']
    %8 = vsyncpa [#allocation4], 0
    loop: start=0, step=1, limit=10
    $region2: #{_lambda_.5} parent=1 // loop_pre_header
      _
    $region3: #{_lambda_.5} parent=1 // loop_header
      %s10 = sphi 0, %s14
      %p11 = scmp.ge.s32.totalorder %s10, 10
      %s20 = sphi 0, %s22
      %s23 = sphi 0, %s20
      %s24 = sphi 0, %s23
      %s40 = sphi 0, %s24
      %s46 = sphi 0, %s48
      %s49 = sphi 0, %s46
      %s50 = sphi 0, %s49
      %s66 = sphi 0, %s50
      %s70 = sphi 0, %s70
      %s72 = sphi 0, %s70
      %s73 = sphi 0, %s72
      %s87 = sphi 0, %s73
      %s91 = sphi 0, %s91
      %s93 = sphi 0, %s91
      %s94 = sphi 0, %s93
      %s108 = sphi 0, %s94
    $region4: #{_lambda_.5} parent=1 // loop_header_branch
      %13 = sbr.rel (%p11) target = $region8
    $region5: #{_lambda_.5} parent=1 // loop_body
      %s15 = ssub.s32 %s10, 1
      %s16 = ssub.s32 %s10, 2
      %s17 = sadd.s32 %s10, 1
      %s18 = ssub.s32 %s10, %s17
      %p19 = scmp.eq.s32.totalorder %s18, 0
      %s21 = sadd.s32 %s20, 1
      %s22 = scalar_select %p19, %s20, %s21
      %p25 = pneg %p19
      %p26 = scmp.eq.s32.totalorder %s10, 7
      %p27 = por %p25, %p26
      %p28 = scmp.ne.s32.totalorder %s20, %s23
      %p29 = scmp.eq.s32.totalorder %s10, 0
      %p30 = por %p28, %p29
      %p31 = scmp.ne.s32.totalorder %s20, %s23
      %p32 = scmp.eq.s32.totalorder %s15, 7
      %p33 = por %p31, %p32
      %p34 = scmp.ne.s32.totalorder %s23, %s24
      %p35 = scmp.eq.s32.totalorder %s15, 0
      %p36 = por %p34, %p35
      %p37 = scmp.ne.s32.totalorder %s23, %s24
      %p38 = scmp.eq.s32.totalorder %s16, 7
      %p39 = por %p37, %p38
      %p41 = scmp.ne.s32.totalorder %s24, %s40
      %p42 = scmp.eq.s32.totalorder %s16, 0
      %p43 = por %p41, %p42
      %s44 = ssub.s32 %s10, %s17
      %p45 = scmp.eq.s32.totalorder %s44, 0
      %s47 = sadd.s32 %s46, 1
      %s48 = scalar_select %p45, %s46, %s47
      %p51 = pneg %p45
      %p52 = scmp.eq.s32.totalorder %s10, 7
      %p53 = por %p51, %p52
      %p54 = scmp.ne.s32.totalorder %s46, %s49
      %p55 = scmp.eq.s32.totalorder %s10, 0
      %p56 = por %p54, %p55
      %p57 = scmp.ne.s32.totalorder %s46, %s49
      %p58 = scmp.eq.s32.totalorder %s15, 7
      %p59 = por %p57, %p58
      %p60 = scmp.ne.s32.totalorder %s49, %s50
      %p61 = scmp.eq.s32.totalorder %s15, 0
      %p62 = por %p60, %p61
      %p63 = scmp.ne.s32.totalorder %s49, %s50
      %p64 = scmp.eq.s32.totalorder %s16, 7
      %p65 = por %p63, %p64
      %p67 = scmp.ne.s32.totalorder %s50, %s66
      %p68 = scmp.eq.s32.totalorder %s16, 0
      %p69 = por %p67, %p68
      %s71 = sadd.s32 %s70, 1
      %p74 = scmp.eq.s32.totalorder %s10, 7
      %p75 = scmp.ne.s32.totalorder %s70, %s72
      %p76 = scmp.eq.s32.totalorder %s10, 0
      %p77 = por %p75, %p76
      %p78 = scmp.ne.s32.totalorder %s70, %s72
      %p79 = scmp.eq.s32.totalorder %s15, 7
      %p80 = por %p78, %p79
      %p81 = scmp.ne.s32.totalorder %s72, %s73
      %p82 = scmp.eq.s32.totalorder %s15, 0
      %p83 = por %p81, %p82
      %p84 = scmp.ne.s32.totalorder %s72, %s73
      %p85 = scmp.eq.s32.totalorder %s16, 7
      %p86 = por %p84, %p85
      %p88 = scmp.ne.s32.totalorder %s73, %s87
      %p89 = scmp.eq.s32.totalorder %s16, 0
      %p90 = por %p88, %p89
      %s92 = sadd.s32 %s91, 1
      %p95 = scmp.eq.s32.totalorder %s10, 7
      %p96 = scmp.ne.s32.totalorder %s91, %s93
      %p97 = scmp.eq.s32.totalorder %s10, 0
      %p98 = por %p96, %p97
      %p99 = scmp.ne.s32.totalorder %s91, %s93
      %p100 = scmp.eq.s32.totalorder %s15, 7
      %p101 = por %p99, %p100
      %p102 = scmp.ne.s32.totalorder %s93, %s94
      %p103 = scmp.eq.s32.totalorder %s15, 0
      %p104 = por %p102, %p103
      %p105 = scmp.ne.s32.totalorder %s93, %s94
      %p106 = scmp.eq.s32.totalorder %s16, 7
      %p107 = por %p105, %p106
      %p109 = scmp.ne.s32.totalorder %s94, %s108
      %p110 = scmp.eq.s32.totalorder %s16, 0
      %p111 = por %p109, %p110
      %p112 = scmp.le.s32.totalorder 1, %s10
      %p113 = scmp.lt.s32.totalorder %s10, 9
      %p114 = pnand %p112, %p113
      %p115 = pneg %p114
      // Predicated region
      $region9: #{_lambda_.5} parent=5 // pred_check
        _
      $region10: #{_lambda_.5} parent=5 // pred_check_branch
        %117 = sbr.rel (%p114) target = $region12
      $region11: #{_lambda_.5} parent=5 // pred_region
        %s118 = ssub.s32 %s10, 1
        // Predicated region
        $region13: #{_lambda_.5} parent=11 // pred_check
          %p119 = pneg %p83
        $region14: #{_lambda_.5} parent=11 // pred_check_branch
          %121 = sbr.rel (%p119) target = $region16
        $region15: #{_lambda_.5} parent=11 // pred_region
          _
        $region16: #{_lambda_.5} parent=11 // pred_fallthru
          _
      $region12: #{_lambda_.5} parent=5 // pred_fallthru
        _
      %p122 = scmp.lt.s32.totalorder %s10, 8
      // Predicated region
      $region17: #{_lambda_.5} parent=5 // pred_check
        %p123 = pneg %p122
      $region18: #{_lambda_.5} parent=5 // pred_check_branch
        %125 = sbr.rel (%p123) target = $region20
      $region19: #{_lambda_.5} parent=5 // pred_region
        // Predicated region
        $region21: #{_lambda_.5} parent=19 // pred_check
          %p126 = pneg %p30
        $region22: #{_lambda_.5} parent=19 // pred_check_branch
          %128 = sbr.rel (%p126) target = $region24
        $region23: #{_lambda_.5} parent=19 // pred_region
          %p129 = scmp.lt.s32.totalorder %s10, 7
          %s130 = scalar_select %p129, %s10, 7
          %s131 = smul.addr %s130, 2
          %s132 = scalar_lea.vmem %s0, %s131
        $region24: #{_lambda_.5} parent=19 // pred_fallthru
          _
        // Predicated region
        $region25: #{_lambda_.5} parent=19 // pred_check
          %p133 = pneg %p56
        $region26: #{_lambda_.5} parent=19 // pred_check_branch
          %135 = sbr.rel (%p133) target = $region28
        $region27: #{_lambda_.5} parent=19 // pred_region
          %p136 = scmp.lt.s32.totalorder %s10, 7
          %s137 = scalar_select %p136, %s10, 7
          %s138 = smul.addr %s137, 4
          %s139 = smul.addr %s138, 4
          %s140 = scalar_lea.vmem %s1, %s139
        $region28: #{_lambda_.5} parent=19 // pred_fallthru
          _
      $region20: #{_lambda_.5} parent=5 // pred_fallthru
        _
      %p141 = scmp.le.s32.totalorder 1, %s10
      %p142 = scmp.lt.s32.totalorder %s10, 9
      %p143 = pnand %p141, %p142
      %p144 = pneg %p143
      // Predicated region
      $region29: #{_lambda_.5} parent=5 // pred_check
        _
      $region30: #{_lambda_.5} parent=5 // pred_check_branch
        %146 = sbr.rel (%p143) target = $region32
      $region31: #{_lambda_.5} parent=5 // pred_region
        %s147 = ssub.s32 %s10, 1
        %p148 = scmp.lt.s32.totalorder %s15, 7
        %s149 = scalar_select %p148, %s15, 7
        %s150 = smul.addr %s149, 2
        %s151 = scalar_lea.vmem %s0, %s150
        %p152 = pneg %p36
        %p153 = pneg %p33
        %p154 = scmp.lt.s32.totalorder %s15, 7
        %s155 = scalar_select %p154, %s15, 7
        %s156 = smul.addr %s155, 4
        %s157 = smul.addr %s156, 4
        %s158 = scalar_lea.vmem %s1, %s157
        %p159 = pneg %p62
        %p160 = pneg %p59
        %p161 = pneg %p83
        %p162 = pneg %p80
        %p163 = pneg %p104
        %p164 = pneg %p101
        %p165 = scmp.lt.s32.totalorder %s15, 7
        %s166 = scalar_select %p165, %s15, 7
        %s167 = smul.addr %s166, 2
        %s168 = scalar_lea.vmem %s0, %s167
        %p169 = scmp.lt.s32.totalorder %s15, 7
        %s170 = scalar_select %p169, %s15, 7
        %s171 = smul.addr %s170, 4
        %s172 = smul.addr %s171, 4
        %s173 = scalar_lea.vmem %s1, %s172
        %p175 = scmp.eq.s32.totalorder %s15, 0
        // Predicated region
        $region33: #{_lambda_.5} parent=31 // pred_check
          %p176 = pneg %p175
        $region34: #{_lambda_.5} parent=31 // pred_check_branch
          %178 = sbr.rel (%p176) target = $region36
        $region35: #{_lambda_.5} parent=31 // pred_region
          %vm179 = vcmask 254976
          %180 = vst.msk [vmem:[#allocation2] sm:$0x3] %vm179, 0.0
        $region36: #{_lambda_.5} parent=31 // pred_fallthru
          _
        %v181 = vld [vmem:[%s168] sm:$0x3]
        %v182 = vpack.c.bf16 %v181, %v181
        %v183 = vld [vmem:[%s173] sm:$0xf]
        %v184 = vld [vmem:[%s173 + $0x4] sm:$0xf]
        %v185 = vld [vmem:[%s173 + $0x8] sm:$0xf]
        %v186 = vld [vmem:[%s173 + $0xc] sm:$0xf]
        %v187 = vld [vmem:[#allocation2] sm:$0x3]
        %v192 = vunpack.c.l.b16 %v183
        %v193 = vunpack.c.l.b16 %v184
        %v194 = vunpack.c.l.b16 %v185
        %v195 = vunpack.c.l.b16 %v186
        %v196 = vpack.c.b16 %v193, %v192
        %v197 = vpack.c.b16 %v195, %v194
        %vm198 = vcmask 72704
        %v200 = vsel %vm198, %v182, 0
        %v203 = vsel %vm198, %v196, 0
        %v206 = vsel %vm198, %v197, 0
        %208 = vmatpush.bf16.xpose.msra.mxu0 0
        %209 = vmatpush.bf16.xpose.msra.mxu0 0
        %210 = vmatpush.bf16.xpose.msra.mxu0 0
        %211 = vmatpush.bf16.xpose.msra.mxu0 0
        %212 = vmatpush.bf16.xpose.msra.mxu0 0
        %213 = vmatpush.bf16.xpose.msra.mxu0 0
        %214 = vmatpush.bf16.xpose.msra.mxu0 %v206
        %215 = vmatpush.bf16.xpose.msra.mxu0 %v203
        %216 = vmatmul.bf16.gmra.mxu0 %v200
        %v217 = vpop.f32.mrf.mxu0
        %v218 = vadd.f32 0.0, %v217
        %v219 = vpop.f32.mrf.mxu0
        %220 = vdwg.mxu0
        %v221 = vadd.f32 %v187, %v218
        %vm222 = vcmask 254976
        %223 = vst.msk [vmem:[#allocation2] sm:$0x3] %vm222, %v221
        %p224 = scmp.eq.s32.totalorder %s15, 7
        // Predicated region
        $region37: #{_lambda_.5} parent=31 // pred_check
          %p225 = pneg %p224
        $region38: #{_lambda_.5} parent=31 // pred_check_branch
          %227 = sbr.rel (%p225) target = $region40
        $region39: #{_lambda_.5} parent=31 // pred_region
          %v228 = vld [vmem:[#allocation2] sm:$0x3]
          %v229 = vld [vmem:[%s2] sm:$0x1]
          %v231 = vperm.slane %v229, 0
          %v233 = vadd.f32 %v228, %v231
          %v234 = vmax.f32 %v233, 0.0
          %235 = vst.msk [vmem:[#allocation3] sm:$0x3] %vm222, %v234
        $region40: #{_lambda_.5} parent=31 // pred_fallthru
          _
        // Predicated region
        $region41: #{_lambda_.5} parent=31 // pred_check
          %p236 = pneg %p101
        $region42: #{_lambda_.5} parent=31 // pred_check_branch
          %238 = sbr.rel (%p236) target = $region44
        $region43: #{_lambda_.5} parent=31 // pred_region
          %240 = vsyncadd [#allocation4], 0
          %s242 = sshll.u32 [#allocation3], 4
          %s243 = int_to_ptr.vmem [resolvable:$true] %s242
          %s244 = sshll.u32 %s3, 4
          %s245 = int_to_ptr.hbm [resolvable:$true] %s244
          %247 = dma.vmem_to_hbm [thread:$0]  %s243, 32, %s245, [#allocation4]
        $region44: #{_lambda_.5} parent=31 // pred_fallthru
          _
        // Predicated region
        $region45: #{_lambda_.5} parent=31 // pred_check
          %p248 = pneg %p101
        $region46: #{_lambda_.5} parent=31 // pred_check_branch
          %250 = sbr.rel (%p248) target = $region48
        $region47: #{_lambda_.5} parent=31 // pred_region
          %252 = dma.done [#allocation4], 32
        $region48: #{_lambda_.5} parent=31 // pred_fallthru
          _
      $region32: #{_lambda_.5} parent=5 // pred_fallthru
        _
      %p253 = scmp.le.s32.totalorder 2, %s10
      // Predicated region
      $region49: #{_lambda_.5} parent=5 // pred_check
        %p254 = pneg %p253
      $region50: #{_lambda_.5} parent=5 // pred_check_branch
        %256 = sbr.rel (%p254) target = $region52
      $region51: #{_lambda_.5} parent=5 // pred_region
        %s257 = ssub.s32 %s10, 2
      $region52: #{_lambda_.5} parent=5 // pred_fallthru
        _
    $region6: #{_lambda_.5} parent=1 // loop_footer
      %s14 = sadd.s32 1, %s10
    $region7: #{_lambda_.5} parent=1 // loop_footer_branch
      %9 = sbr.rel target = $region3
    $region8: #{_lambda_.5} parent=1 // loop_exit
      _
    %258 = vsyncpa [#allocation4], 1
    %s259 = scalar_lea.sflag [#allocation4], 1
    %260 = vsyncpa %s259, 1

</llo_original>
